<compile_context>
chip_gen: v5e
topology: v5e:2x2
jax: 0.10.0
libtpu: 0.0.40
codegen_flags: <defaults>
</compile_context>

<pallas_src>
import functools

import numpy as np
import jax
import jax.numpy as jnp
from jax import lax
from jax.experimental import pallas as pl
from jax.experimental.pallas import tpu as pltpu


# ----------------------------------------------------------------------------
# Host-side weight expansion (tiny glue; maps convs onto lane-dense matmuls)
# ----------------------------------------------------------------------------
def _expand_conv3x3(w, W, P):
    """(3,3,Cin,Cout) -> (3, P*W*Cin, P*W*Cout) packed row-matmul weights.

    Slab row r holds image rows r*P .. r*P+P-1, laid out along lanes as
    (sub_row, col, channel).  For slab offset d in {0,1,2} (i.e. input slab
    row r+d-1), out_slab_row(r) += in_slab_row(r+d-1) @ M[d].  The W-axis
    'same' zero padding is baked into M; the H-axis padding is a zero slab
    row concatenated in-kernel.
    """
    _, _, cin, cout = w.shape
    # Per-kernel-row (W*Cin, W*Cout) matrices (taps outside [0, W) dropped).
    row_mats = []
    for dy in range(3):
        E = jnp.zeros((W, cin, W, cout), w.dtype)
        for dx in range(3):
            xo = np.arange(W)            # output column
            xi = xo + dx - 1             # input column for this tap
            m = (xi >= 0) & (xi < W)
            E = E.at[xi[m], :, xo[m], :].set(w[dy, dx])
        row_mats.append(E.reshape(W * cin, W * cout))
    zero = jnp.zeros((W * cin, W * cout), w.dtype)

    # Assemble packed (P*W*Cin, P*W*Cout) matrices for slab offsets d = 0,1,2.
    packed = []
    for d in range(3):
        rows = []
        for s_in in range(P):
            cols = []
            for s_out in range(P):
                # input image row = (r+d-1)*P + s_in ; output = r*P + s_out
                dy = (d - 1) * P + s_in - s_out + 1
                cols.append(row_mats[dy] if 0 <= dy <= 2 else zero)
            rows.append(jnp.concatenate(cols, axis=1))
        packed.append(jnp.concatenate(rows, axis=0))
    return jnp.stack(packed)              # (3, P*W*Cin, P*W*Cout)


def _expand_conv1x1(w, W, P):
    """(Cin,Cout) -> block-diagonal (P*W*Cin, P*W*Cout) for the slab layout."""
    cin, cout = w.shape
    PW = P * W
    E = jnp.zeros((PW, cin, PW, cout), w.dtype)
    i = np.arange(PW)
    E = E.at[i, :, i, :].set(w)
    return E.reshape(PW * cin, PW * cout)


def _choose_pack(H, W, C):
    """Rows packed into the lane axis so the last dim hits 128 when possible."""
    wc = W * C
    P = 1
    if wc <= 128 and 128 % wc == 0:
        P = 128 // wc
        while P > 1 and H % P != 0:
            P //= 2
    return P


# ----------------------------------------------------------------------------
# Fused kernel: whole CascadingBlock for one batch element per grid step
# ----------------------------------------------------------------------------
def _cascading_kernel(x_ref, w3_ref, b3_ref, wp_ref, bp_ref, o_ref):
    Hp, L = x_ref.shape[1], x_ref.shape[2]
    f32 = jnp.float32
    cdt = w3_ref.dtype                     # matmul compute dtype (bf16 or f32)

    x = x_ref[0]                           # (Hp, L) f32 packed row slab
    zrow = jnp.zeros((1, L), cdt)          # hoisted; shared by all 6 convs

    def conv3x3(a, layer):
        # 'same' 3x3 conv on a packed row slab: 3 matmuls vs expanded weights.
        ap = jnp.concatenate([zrow, a.astype(cdt), zrow], axis=0)  # (Hp+2, L)
        acc = jnp.dot(ap[0:Hp, :], w3_ref[layer * 3 + 0],
                      preferred_element_type=f32)
        for d in (1, 2):
            acc = acc + jnp.dot(ap[d:d + Hp, :], w3_ref[layer * 3 + d],
                                preferred_element_type=f32)
        return acc + b3_ref[pl.ds(layer, 1), :]          # (1, L) bias broadcast

    def residual(a, layer0):
        h = jnp.maximum(conv3x3(a, layer0), 0.0)             # relu(conv1(a))
        return jnp.maximum(conv3x3(h, layer0 + 1) + a, 0.0)  # relu(conv2(h)+a)

    def conv1x1(segs, seg0, bidx):
        # 1x1 conv over an (implicit) channel concat: sum of segment matmuls.
        acc = jnp.dot(segs[0].astype(cdt), wp_ref[seg0],
                      preferred_element_type=f32)
        for k in range(1, len(segs)):
            acc = acc + jnp.dot(segs[k].astype(cdt), wp_ref[seg0 + k],
                                preferred_element_type=f32)
        return acc + bp_ref[pl.ds(bidx, 1), :]

    b1 = residual(x, 0)
    o1 = conv1x1((x, b1), 0, 0)
    b2 = residual(o1, 2)
    o2 = conv1x1((x, b1, b2), 2, 1)
    b3 = residual(o2, 4)
    o3 = conv1x1((x, b1, b2, b3), 5, 2)

    o_ref[0] = o3.astype(o_ref.dtype)


# ----------------------------------------------------------------------------
# Public wrapper (NCHW in / NCHW out, like the PyTorch module)
# ----------------------------------------------------------------------------
@functools.partial(jax.jit, static_argnames="compute_dtype")
def cascading_block(x_nchw, params, compute_dtype=jnp.bfloat16):
    x = jnp.transpose(x_nchw, (0, 2, 3, 1)).astype(jnp.float32)  # NCHW -> NHWC
    N, H, W, C = x.shape
    P = _choose_pack(H, W, C)              # rows folded into lanes (2 here)
    Hp, L = H // P, P * W * C              # lane-dense: L == 128 for demo
    x_slab = x.reshape(N, Hp, L)

    # ---- weight prep (small; would be precomputed once in production) ----
    w3_list, b3_list = [], []
    for name in ("r1", "r2", "r3"):
        w1, b1, w2, b2 = params[name]
        w3_list.append(_expand_conv3x3(w1, W, P))
        w3_list.append(_expand_conv3x3(w2, W, P))
        b3_list.append(jnp.tile(b1, P * W))
        b3_list.append(jnp.tile(b2, P * W))
    w3 = jnp.concatenate(w3_list, axis=0).astype(compute_dtype)  # (18, L, L)
    b3 = jnp.stack(b3_list).astype(jnp.float32)                  # (6, L)

    wp_list, bp_list = [], []
    for k, name in enumerate(("c1", "c2", "c3")):
        wk, bk = params[name]                  # ((k+2)*C, C), (C,)
        for s in range(k + 2):                 # segments: [x, b1, ...] order
            wp_list.append(_expand_conv1x1(wk[s * C:(s + 1) * C, :], W, P))
        bp_list.append(jnp.tile(bk, P * W))
    wp = jnp.stack(wp_list).astype(compute_dtype)                # (9, L, L)
    bp = jnp.stack(bp_list).astype(jnp.float32)                  # (3, L)

    out_slab = pl.pallas_call(
        _cascading_kernel,
        out_shape=jax.ShapeDtypeStruct((N, Hp, L), jnp.float32),
        grid=(N,),
        in_specs=[
            pl.BlockSpec((1, Hp, L), lambda n: (n, 0, 0)),
            pl.BlockSpec((18, L, L), lambda n: (0, 0, 0)),
            pl.BlockSpec((6, L), lambda n: (0, 0)),
            pl.BlockSpec((9, L, L), lambda n: (0, 0, 0)),
            pl.BlockSpec((3, L), lambda n: (0, 0)),
        ],
        out_specs=pl.BlockSpec((1, Hp, L), lambda n: (n, 0, 0)),
        compiler_params=pltpu.CompilerParams(
            dimension_semantics=("parallel",),
        ),
    )(x_slab, w3, b3, wp, bp)

    out = out_slab.reshape(N, Hp, P, W, C).reshape(N, H, W, C)
    return jnp.transpose(out, (0, 3, 1, 2))                      # back to NCHW


# ----------------------------------------------------------------------------
# Deterministic parameter init (PyTorch-like uniform(-k, k), k = 1/sqrt(fan_in))
# ----------------------------------------------------------------------------
def _init_conv(key, kh, kw, cin, cout):
    kw_, kb_ = jax.random.split(key)
    bound = 1.0 / float(np.sqrt(cin * kh * kw))
    if kh == 1 and kw == 1:
        w = jax.random.uniform(kw_, (cin, cout), jnp.float32, -bound, bound)
    else:
        w = jax.random.uniform(kw_, (kh, kw, cin, cout), jnp.float32, -bound, bound)
    b = jax.random.uniform(kb_, (cout,), jnp.float32, -bound, bound)
    return w, b


def init_params(key, channels):
    keys = jax.random.split(key, 9)
    params = {}
    for i, name in enumerate(["r1", "r2", "r3"]):
        k1, k2 = jax.random.split(keys[i])
        w1, b1 = _init_conv(k1, 3, 3, channels, channels)
        w2, b2 = _init_conv(k2, 3, 3, channels, channels)
        params[name] = (w1, b1, w2, b2)
    params["c1"] = _init_conv(keys[3], 1, 1, channels * 2, channels)
    params["c2"] = _init_conv(keys[4], 1, 1, channels * 3, channels)
    params["c3"] = _init_conv(keys[5], 1, 1, channels * 4, channels)
    return params


# ----------------------------------------------------------------------------
# Pure-JAX reference (for correctness check)
# ----------------------------------------------------------------------------
def _ref_conv3x3(x, w, b):
    y = lax.conv_general_dilated(
        x, w, window_strides=(1, 1), padding="SAME",
        dimension_numbers=("NHWC", "HWIO", "NHWC"),
        precision=lax.Precision.HIGHEST)
    return y + b


def _ref_conv1x1(x, w, b):
    return jnp.einsum("nhwc,co->nhwo", x, w,
                      precision=lax.Precision.HIGHEST) + b


def _ref_residual(x, p):
    w1, b1, w2, b2 = p
    h = jax.nn.relu(_ref_conv3x3(x, w1, b1))
    return jax.nn.relu(_ref_conv3x3(h, w2, b2) + x)


def cascading_block_ref(x_nchw, params):
    x = jnp.transpose(x_nchw, (0, 2, 3, 1)).astype(jnp.float32)
    c0 = o0 = x
    b1 = _ref_residual(o0, params["r1"])
    c1 = jnp.concatenate([c0, b1], axis=-1)
    o1 = _ref_conv1x1(c1, *params["c1"])
    b2 = _ref_residual(o1, params["r2"])
    c2 = jnp.concatenate([c1, b2], axis=-1)
    o2 = _ref_conv1x1(c2, *params["c2"])
    b3 = _ref_residual(o2, params["r3"])
    c3 = jnp.concatenate([c2, b3], axis=-1)
    o3 = _ref_conv1x1(c3, *params["c3"])
    return jnp.transpose(o3, (0, 3, 1, 2))


# ----------------------------------------------------------------------------
if __name__ == "__main__":
    N, C, H, W = 2, 4, 16, 16
    key = jax.random.PRNGKey(0)
    kx, kp = jax.random.split(key)
    x = jax.random.normal(kx, (N, C, H, W), dtype=jnp.float32)  # NCHW input
    params = init_params(kp, C)

    ref = jax.block_until_ready(cascading_block_ref(x, params))

    # f32 matmul-operand path: tighter check of the fused-kernel math.
    out_f32 = jax.block_until_ready(
        cascading_block(x, params, compute_dtype=jnp.float32))
    assert out_f32.shape == (N, C, H, W), out_f32.shape
    err_f32 = float(jnp.max(jnp.abs(out_f32 - ref)))
    assert jnp.allclose(out_f32, ref, rtol=2e-2, atol=2e-2), err_f32

    # bf16 matmul-operand path (default, fast): looser tolerance.
    out = jax.block_until_ready(cascading_block(x, params))
    assert out.shape == (N, C, H, W), out.shape
    err_bf16 = float(jnp.max(jnp.abs(out - ref)))
    assert jnp.allclose(out, ref, rtol=7e-2, atol=7e-2), err_bf16

    print("KERNEL_OK")
</pallas_src>

<mosaic_0001>
module attributes {stable_mosaic.version = 11 : i64} {
  func.func @_cascading_kernel(%arg0: i32, %arg1: memref<1x8x128xf32, #tpu.memory_space<vmem>>, %arg2: memref<18x128x128xf32, #tpu.memory_space<vmem>>, %arg3: memref<6x128xf32, #tpu.memory_space<vmem>>, %arg4: memref<9x128x128xf32, #tpu.memory_space<vmem>>, %arg5: memref<3x128xf32, #tpu.memory_space<vmem>>, %arg6: memref<1x8x128xf32, #tpu.memory_space<vmem>>) attributes {dimension_semantics = [#tpu.dimension_semantics<parallel>], iteration_bounds = array<i64: 2>, scalar_prefetch = 0 : i64, scratch_operands = 0 : i64, tpu.core_type = #tpu.core_type<tc>, window_params = [{transform_indices = @transform_0, window_bounds = array<i64: 1, 8, 128>}, {pipeline_mode = #tpu.pipeline_mode<synchronous>, transform_indices = @transform_1, window_bounds = array<i64: 18, 128, 128>}, {pipeline_mode = #tpu.pipeline_mode<synchronous>, transform_indices = @transform_2, window_bounds = array<i64: 6, 128>}, {pipeline_mode = #tpu.pipeline_mode<synchronous>, transform_indices = @transform_3, window_bounds = array<i64: 9, 128, 128>}, {pipeline_mode = #tpu.pipeline_mode<synchronous>, transform_indices = @transform_4, window_bounds = array<i64: 3, 128>}, {transform_indices = @transform_5, window_bounds = array<i64: 1, 8, 128>}]} {
    %c0 = arith.constant 0 : index
    %c0_0 = arith.constant 0 : index
    %c0_1 = arith.constant 0 : index
    %0 = vector.load %arg1[%c0, %c0_0, %c0_1] : memref<1x8x128xf32, #tpu.memory_space<vmem>>, vector<1x8x128xf32>
    %1 = vector.shape_cast %0 : vector<1x8x128xf32> to vector<8x128xf32>
    %cst = arith.constant 0.000000e+00 : f32
    %2 = vector.broadcast %cst : f32 to vector<1x128xf32>
    %3 = tpu.concatenate %2, %1, %2 in 0 : vector<1x128xf32>, vector<8x128xf32>, vector<1x128xf32> -> vector<10x128xf32>
    %4 = vector.extract_strided_slice %3 {offsets = [0, 0], sizes = [8, 128], strides = [1, 1]} : vector<10x128xf32> to vector<8x128xf32>
    %c0_2 = arith.constant 0 : index
    %c0_3 = arith.constant 0 : index
    %c0_4 = arith.constant 0 : index
    %5 = vector.load %arg2[%c0_2, %c0_3, %c0_4] : memref<18x128x128xf32, #tpu.memory_space<vmem>>, vector<1x128x128xf32>
    %6 = vector.shape_cast %5 : vector<1x128x128xf32> to vector<128x128xf32>
    %cst_5 = arith.constant dense<0.000000e+00> : vector<8x128xf32>
    %7 = tpu.matmul %4, %6, %cst_5 {dimension_numbers = #tpu.dot_dimension_numbers<[1], [0], [0], [1], [0, 0, 1, 1], [], []>} : vector<8x128xf32>, vector<128x128xf32>, vector<8x128xf32> -> vector<8x128xf32>
    %8 = vector.extract_strided_slice %3 {offsets = [1, 0], sizes = [8, 128], strides = [1, 1]} : vector<10x128xf32> to vector<8x128xf32>
    %c1 = arith.constant 1 : index
    %c0_6 = arith.constant 0 : index
    %c0_7 = arith.constant 0 : index
    %9 = vector.load %arg2[%c1, %c0_6, %c0_7] : memref<18x128x128xf32, #tpu.memory_space<vmem>>, vector<1x128x128xf32>
    %10 = vector.shape_cast %9 : vector<1x128x128xf32> to vector<128x128xf32>
    %cst_8 = arith.constant dense<0.000000e+00> : vector<8x128xf32>
    %11 = tpu.matmul %8, %10, %cst_8 {dimension_numbers = #tpu.dot_dimension_numbers<[1], [0], [0], [1], [0, 0, 1, 1], [], []>} : vector<8x128xf32>, vector<128x128xf32>, vector<8x128xf32> -> vector<8x128xf32>
    %12 = arith.addf %7, %11 : vector<8x128xf32>
    %13 = vector.extract_strided_slice %3 {offsets = [2, 0], sizes = [8, 128], strides = [1, 1]} : vector<10x128xf32> to vector<8x128xf32>
    %c2 = arith.constant 2 : index
    %c0_9 = arith.constant 0 : index
    %c0_10 = arith.constant 0 : index
    %14 = vector.load %arg2[%c2, %c0_9, %c0_10] : memref<18x128x128xf32, #tpu.memory_space<vmem>>, vector<1x128x128xf32>
    %15 = vector.shape_cast %14 : vector<1x128x128xf32> to vector<128x128xf32>
    %cst_11 = arith.constant dense<0.000000e+00> : vector<8x128xf32>
    %16 = tpu.matmul %13, %15, %cst_11 {dimension_numbers = #tpu.dot_dimension_numbers<[1], [0], [0], [1], [0, 0, 1, 1], [], []>} : vector<8x128xf32>, vector<128x128xf32>, vector<8x128xf32> -> vector<8x128xf32>
    %17 = arith.addf %12, %16 : vector<8x128xf32>
    %c0_12 = arith.constant 0 : index
    %c0_13 = arith.constant 0 : index
    %18 = vector.load %arg3[%c0_12, %c0_13] : memref<6x128xf32, #tpu.memory_space<vmem>>, vector<1x128xf32>
    %19 = vector.broadcast %18 : vector<1x128xf32> to vector<8x128xf32>
    %20 = arith.addf %17, %19 : vector<8x128xf32>
    %cst_14 = arith.constant 0.000000e+00 : f32
    %21 = vector.broadcast %cst_14 : f32 to vector<8x128xf32>
    %22 = arith.maximumf %20, %21 : vector<8x128xf32>
    %23 = tpu.concatenate %2, %22, %2 in 0 : vector<1x128xf32>, vector<8x128xf32>, vector<1x128xf32> -> vector<10x128xf32>
    %24 = vector.extract_strided_slice %23 {offsets = [0, 0], sizes = [8, 128], strides = [1, 1]} : vector<10x128xf32> to vector<8x128xf32>
    %c3 = arith.constant 3 : index
    %c0_15 = arith.constant 0 : index
    %c0_16 = arith.constant 0 : index
    %25 = vector.load %arg2[%c3, %c0_15, %c0_16] : memref<18x128x128xf32, #tpu.memory_space<vmem>>, vector<1x128x128xf32>
    %26 = vector.shape_cast %25 : vector<1x128x128xf32> to vector<128x128xf32>
    %cst_17 = arith.constant dense<0.000000e+00> : vector<8x128xf32>
    %27 = tpu.matmul %24, %26, %cst_17 {dimension_numbers = #tpu.dot_dimension_numbers<[1], [0], [0], [1], [0, 0, 1, 1], [], []>} : vector<8x128xf32>, vector<128x128xf32>, vector<8x128xf32> -> vector<8x128xf32>
    %28 = vector.extract_strided_slice %23 {offsets = [1, 0], sizes = [8, 128], strides = [1, 1]} : vector<10x128xf32> to vector<8x128xf32>
    %c4 = arith.constant 4 : index
    %c0_18 = arith.constant 0 : index
    %c0_19 = arith.constant 0 : index
    %29 = vector.load %arg2[%c4, %c0_18, %c0_19] : memref<18x128x128xf32, #tpu.memory_space<vmem>>, vector<1x128x128xf32>
    %30 = vector.shape_cast %29 : vector<1x128x128xf32> to vector<128x128xf32>
    %cst_20 = arith.constant dense<0.000000e+00> : vector<8x128xf32>
    %31 = tpu.matmul %28, %30, %cst_20 {dimension_numbers = #tpu.dot_dimension_numbers<[1], [0], [0], [1], [0, 0, 1, 1], [], []>} : vector<8x128xf32>, vector<128x128xf32>, vector<8x128xf32> -> vector<8x128xf32>
    %32 = arith.addf %27, %31 : vector<8x128xf32>
    %33 = vector.extract_strided_slice %23 {offsets = [2, 0], sizes = [8, 128], strides = [1, 1]} : vector<10x128xf32> to vector<8x128xf32>
    %c5 = arith.constant 5 : index
    %c0_21 = arith.constant 0 : index
    %c0_22 = arith.constant 0 : index
    %34 = vector.load %arg2[%c5, %c0_21, %c0_22] : memref<18x128x128xf32, #tpu.memory_space<vmem>>, vector<1x128x128xf32>
    %35 = vector.shape_cast %34 : vector<1x128x128xf32> to vector<128x128xf32>
    %cst_23 = arith.constant dense<0.000000e+00> : vector<8x128xf32>
    %36 = tpu.matmul %33, %35, %cst_23 {dimension_numbers = #tpu.dot_dimension_numbers<[1], [0], [0], [1], [0, 0, 1, 1], [], []>} : vector<8x128xf32>, vector<128x128xf32>, vector<8x128xf32> -> vector<8x128xf32>
    %37 = arith.addf %32, %36 : vector<8x128xf32>
    %c1_24 = arith.constant 1 : index
    %c0_25 = arith.constant 0 : index
    %38 = vector.load %arg3[%c1_24, %c0_25] : memref<6x128xf32, #tpu.memory_space<vmem>>, vector<1x128xf32>
    %39 = vector.broadcast %38 : vector<1x128xf32> to vector<8x128xf32>
    %40 = arith.addf %37, %39 : vector<8x128xf32>
    %41 = arith.addf %40, %1 : vector<8x128xf32>
    %cst_26 = arith.constant 0.000000e+00 : f32
    %42 = vector.broadcast %cst_26 : f32 to vector<8x128xf32>
    %43 = arith.maximumf %41, %42 : vector<8x128xf32>
    %c0_27 = arith.constant 0 : index
    %c0_28 = arith.constant 0 : index
    %c0_29 = arith.constant 0 : index
    %44 = vector.load %arg4[%c0_27, %c0_28, %c0_29] : memref<9x128x128xf32, #tpu.memory_space<vmem>>, vector<1x128x128xf32>
    %45 = vector.shape_cast %44 : vector<1x128x128xf32> to vector<128x128xf32>
    %cst_30 = arith.constant dense<0.000000e+00> : vector<8x128xf32>
    %46 = tpu.matmul %1, %45, %cst_30 {dimension_numbers = #tpu.dot_dimension_numbers<[1], [0], [0], [1], [0, 0, 1, 1], [], []>} : vector<8x128xf32>, vector<128x128xf32>, vector<8x128xf32> -> vector<8x128xf32>
    %c1_31 = arith.constant 1 : index
    %c0_32 = arith.constant 0 : index
    %c0_33 = arith.constant 0 : index
    %47 = vector.load %arg4[%c1_31, %c0_32, %c0_33] : memref<9x128x128xf32, #tpu.memory_space<vmem>>, vector<1x128x128xf32>
    %48 = vector.shape_cast %47 : vector<1x128x128xf32> to vector<128x128xf32>
    %cst_34 = arith.constant dense<0.000000e+00> : vector<8x128xf32>
    %49 = tpu.matmul %43, %48, %cst_34 {dimension_numbers = #tpu.dot_dimension_numbers<[1], [0], [0], [1], [0, 0, 1, 1], [], []>} : vector<8x128xf32>, vector<128x128xf32>, vector<8x128xf32> -> vector<8x128xf32>
    %50 = arith.addf %46, %49 : vector<8x128xf32>
    %c0_35 = arith.constant 0 : index
    %c0_36 = arith.constant 0 : index
    %51 = vector.load %arg5[%c0_35, %c0_36] : memref<3x128xf32, #tpu.memory_space<vmem>>, vector<1x128xf32>
    %52 = vector.broadcast %51 : vector<1x128xf32> to vector<8x128xf32>
    %53 = arith.addf %50, %52 : vector<8x128xf32>
    %54 = tpu.concatenate %2, %53, %2 in 0 : vector<1x128xf32>, vector<8x128xf32>, vector<1x128xf32> -> vector<10x128xf32>
    %55 = vector.extract_strided_slice %54 {offsets = [0, 0], sizes = [8, 128], strides = [1, 1]} : vector<10x128xf32> to vector<8x128xf32>
    %c6 = arith.constant 6 : index
    %c0_37 = arith.constant 0 : index
    %c0_38 = arith.constant 0 : index
    %56 = vector.load %arg2[%c6, %c0_37, %c0_38] : memref<18x128x128xf32, #tpu.memory_space<vmem>>, vector<1x128x128xf32>
    %57 = vector.shape_cast %56 : vector<1x128x128xf32> to vector<128x128xf32>
    %cst_39 = arith.constant dense<0.000000e+00> : vector<8x128xf32>
    %58 = tpu.matmul %55, %57, %cst_39 {dimension_numbers = #tpu.dot_dimension_numbers<[1], [0], [0], [1], [0, 0, 1, 1], [], []>} : vector<8x128xf32>, vector<128x128xf32>, vector<8x128xf32> -> vector<8x128xf32>
    %59 = vector.extract_strided_slice %54 {offsets = [1, 0], sizes = [8, 128], strides = [1, 1]} : vector<10x128xf32> to vector<8x128xf32>
    %c7 = arith.constant 7 : index
    %c0_40 = arith.constant 0 : index
    %c0_41 = arith.constant 0 : index
    %60 = vector.load %arg2[%c7, %c0_40, %c0_41] : memref<18x128x128xf32, #tpu.memory_space<vmem>>, vector<1x128x128xf32>
    %61 = vector.shape_cast %60 : vector<1x128x128xf32> to vector<128x128xf32>
    %cst_42 = arith.constant dense<0.000000e+00> : vector<8x128xf32>
    %62 = tpu.matmul %59, %61, %cst_42 {dimension_numbers = #tpu.dot_dimension_numbers<[1], [0], [0], [1], [0, 0, 1, 1], [], []>} : vector<8x128xf32>, vector<128x128xf32>, vector<8x128xf32> -> vector<8x128xf32>
    %63 = arith.addf %58, %62 : vector<8x128xf32>
    %64 = vector.extract_strided_slice %54 {offsets = [2, 0], sizes = [8, 128], strides = [1, 1]} : vector<10x128xf32> to vector<8x128xf32>
    %c8 = arith.constant 8 : index
    %c0_43 = arith.constant 0 : index
    %c0_44 = arith.constant 0 : index
    %65 = vector.load %arg2[%c8, %c0_43, %c0_44] : memref<18x128x128xf32, #tpu.memory_space<vmem>>, vector<1x128x128xf32>
    %66 = vector.shape_cast %65 : vector<1x128x128xf32> to vector<128x128xf32>
    %cst_45 = arith.constant dense<0.000000e+00> : vector<8x128xf32>
    %67 = tpu.matmul %64, %66, %cst_45 {dimension_numbers = #tpu.dot_dimension_numbers<[1], [0], [0], [1], [0, 0, 1, 1], [], []>} : vector<8x128xf32>, vector<128x128xf32>, vector<8x128xf32> -> vector<8x128xf32>
    %68 = arith.addf %63, %67 : vector<8x128xf32>
    %c2_46 = arith.constant 2 : index
    %c0_47 = arith.constant 0 : index
    %69 = vector.load %arg3[%c2_46, %c0_47] : memref<6x128xf32, #tpu.memory_space<vmem>>, vector<1x128xf32>
    %70 = vector.broadcast %69 : vector<1x128xf32> to vector<8x128xf32>
    %71 = arith.addf %68, %70 : vector<8x128xf32>
    %cst_48 = arith.constant 0.000000e+00 : f32
    %72 = vector.broadcast %cst_48 : f32 to vector<8x128xf32>
    %73 = arith.maximumf %71, %72 : vector<8x128xf32>
    %74 = tpu.concatenate %2, %73, %2 in 0 : vector<1x128xf32>, vector<8x128xf32>, vector<1x128xf32> -> vector<10x128xf32>
    %75 = vector.extract_strided_slice %74 {offsets = [0, 0], sizes = [8, 128], strides = [1, 1]} : vector<10x128xf32> to vector<8x128xf32>
    %c9 = arith.constant 9 : index
    %c0_49 = arith.constant 0 : index
    %c0_50 = arith.constant 0 : index
    %76 = vector.load %arg2[%c9, %c0_49, %c0_50] : memref<18x128x128xf32, #tpu.memory_space<vmem>>, vector<1x128x128xf32>
    %77 = vector.shape_cast %76 : vector<1x128x128xf32> to vector<128x128xf32>
    %cst_51 = arith.constant dense<0.000000e+00> : vector<8x128xf32>
    %78 = tpu.matmul %75, %77, %cst_51 {dimension_numbers = #tpu.dot_dimension_numbers<[1], [0], [0], [1], [0, 0, 1, 1], [], []>} : vector<8x128xf32>, vector<128x128xf32>, vector<8x128xf32> -> vector<8x128xf32>
    %79 = vector.extract_strided_slice %74 {offsets = [1, 0], sizes = [8, 128], strides = [1, 1]} : vector<10x128xf32> to vector<8x128xf32>
    %c10 = arith.constant 10 : index
    %c0_52 = arith.constant 0 : index
    %c0_53 = arith.constant 0 : index
    %80 = vector.load %arg2[%c10, %c0_52, %c0_53] : memref<18x128x128xf32, #tpu.memory_space<vmem>>, vector<1x128x128xf32>
    %81 = vector.shape_cast %80 : vector<1x128x128xf32> to vector<128x128xf32>
    %cst_54 = arith.constant dense<0.000000e+00> : vector<8x128xf32>
    %82 = tpu.matmul %79, %81, %cst_54 {dimension_numbers = #tpu.dot_dimension_numbers<[1], [0], [0], [1], [0, 0, 1, 1], [], []>} : vector<8x128xf32>, vector<128x128xf32>, vector<8x128xf32> -> vector<8x128xf32>
    %83 = arith.addf %78, %82 : vector<8x128xf32>
    %84 = vector.extract_strided_slice %74 {offsets = [2, 0], sizes = [8, 128], strides = [1, 1]} : vector<10x128xf32> to vector<8x128xf32>
    %c11 = arith.constant 11 : index
    %c0_55 = arith.constant 0 : index
    %c0_56 = arith.constant 0 : index
    %85 = vector.load %arg2[%c11, %c0_55, %c0_56] : memref<18x128x128xf32, #tpu.memory_space<vmem>>, vector<1x128x128xf32>
    %86 = vector.shape_cast %85 : vector<1x128x128xf32> to vector<128x128xf32>
    %cst_57 = arith.constant dense<0.000000e+00> : vector<8x128xf32>
    %87 = tpu.matmul %84, %86, %cst_57 {dimension_numbers = #tpu.dot_dimension_numbers<[1], [0], [0], [1], [0, 0, 1, 1], [], []>} : vector<8x128xf32>, vector<128x128xf32>, vector<8x128xf32> -> vector<8x128xf32>
    %88 = arith.addf %83, %87 : vector<8x128xf32>
    %c3_58 = arith.constant 3 : index
    %c0_59 = arith.constant 0 : index
    %89 = vector.load %arg3[%c3_58, %c0_59] : memref<6x128xf32, #tpu.memory_space<vmem>>, vector<1x128xf32>
    %90 = vector.broadcast %89 : vector<1x128xf32> to vector<8x128xf32>
    %91 = arith.addf %88, %90 : vector<8x128xf32>
    %92 = arith.addf %91, %53 : vector<8x128xf32>
    %cst_60 = arith.constant 0.000000e+00 : f32
    %93 = vector.broadcast %cst_60 : f32 to vector<8x128xf32>
    %94 = arith.maximumf %92, %93 : vector<8x128xf32>
    %c2_61 = arith.constant 2 : index
    %c0_62 = arith.constant 0 : index
    %c0_63 = arith.constant 0 : index
    %95 = vector.load %arg4[%c2_61, %c0_62, %c0_63] : memref<9x128x128xf32, #tpu.memory_space<vmem>>, vector<1x128x128xf32>
    %96 = vector.shape_cast %95 : vector<1x128x128xf32> to vector<128x128xf32>
    %cst_64 = arith.constant dense<0.000000e+00> : vector<8x128xf32>
    %97 = tpu.matmul %1, %96, %cst_64 {dimension_numbers = #tpu.dot_dimension_numbers<[1], [0], [0], [1], [0, 0, 1, 1], [], []>} : vector<8x128xf32>, vector<128x128xf32>, vector<8x128xf32> -> vector<8x128xf32>
    %c3_65 = arith.constant 3 : index
    %c0_66 = arith.constant 0 : index
    %c0_67 = arith.constant 0 : index
    %98 = vector.load %arg4[%c3_65, %c0_66, %c0_67] : memref<9x128x128xf32, #tpu.memory_space<vmem>>, vector<1x128x128xf32>
    %99 = vector.shape_cast %98 : vector<1x128x128xf32> to vector<128x128xf32>
    %cst_68 = arith.constant dense<0.000000e+00> : vector<8x128xf32>
    %100 = tpu.matmul %43, %99, %cst_68 {dimension_numbers = #tpu.dot_dimension_numbers<[1], [0], [0], [1], [0, 0, 1, 1], [], []>} : vector<8x128xf32>, vector<128x128xf32>, vector<8x128xf32> -> vector<8x128xf32>
    %101 = arith.addf %97, %100 : vector<8x128xf32>
    %c4_69 = arith.constant 4 : index
    %c0_70 = arith.constant 0 : index
    %c0_71 = arith.constant 0 : index
    %102 = vector.load %arg4[%c4_69, %c0_70, %c0_71] : memref<9x128x128xf32, #tpu.memory_space<vmem>>, vector<1x128x128xf32>
    %103 = vector.shape_cast %102 : vector<1x128x128xf32> to vector<128x128xf32>
    %cst_72 = arith.constant dense<0.000000e+00> : vector<8x128xf32>
    %104 = tpu.matmul %94, %103, %cst_72 {dimension_numbers = #tpu.dot_dimension_numbers<[1], [0], [0], [1], [0, 0, 1, 1], [], []>} : vector<8x128xf32>, vector<128x128xf32>, vector<8x128xf32> -> vector<8x128xf32>
    %105 = arith.addf %101, %104 : vector<8x128xf32>
    %c1_73 = arith.constant 1 : index
    %c0_74 = arith.constant 0 : index
    %106 = vector.load %arg5[%c1_73, %c0_74] : memref<3x128xf32, #tpu.memory_space<vmem>>, vector<1x128xf32>
    %107 = vector.broadcast %106 : vector<1x128xf32> to vector<8x128xf32>
    %108 = arith.addf %105, %107 : vector<8x128xf32>
    %109 = tpu.concatenate %2, %108, %2 in 0 : vector<1x128xf32>, vector<8x128xf32>, vector<1x128xf32> -> vector<10x128xf32>
    %110 = vector.extract_strided_slice %109 {offsets = [0, 0], sizes = [8, 128], strides = [1, 1]} : vector<10x128xf32> to vector<8x128xf32>
    %c12 = arith.constant 12 : index
    %c0_75 = arith.constant 0 : index
    %c0_76 = arith.constant 0 : index
    %111 = vector.load %arg2[%c12, %c0_75, %c0_76] : memref<18x128x128xf32, #tpu.memory_space<vmem>>, vector<1x128x128xf32>
    %112 = vector.shape_cast %111 : vector<1x128x128xf32> to vector<128x128xf32>
    %cst_77 = arith.constant dense<0.000000e+00> : vector<8x128xf32>
    %113 = tpu.matmul %110, %112, %cst_77 {dimension_numbers = #tpu.dot_dimension_numbers<[1], [0], [0], [1], [0, 0, 1, 1], [], []>} : vector<8x128xf32>, vector<128x128xf32>, vector<8x128xf32> -> vector<8x128xf32>
    %114 = vector.extract_strided_slice %109 {offsets = [1, 0], sizes = [8, 128], strides = [1, 1]} : vector<10x128xf32> to vector<8x128xf32>
    %c13 = arith.constant 13 : index
    %c0_78 = arith.constant 0 : index
    %c0_79 = arith.constant 0 : index
    %115 = vector.load %arg2[%c13, %c0_78, %c0_79] : memref<18x128x128xf32, #tpu.memory_space<vmem>>, vector<1x128x128xf32>
    %116 = vector.shape_cast %115 : vector<1x128x128xf32> to vector<128x128xf32>
    %cst_80 = arith.constant dense<0.000000e+00> : vector<8x128xf32>
    %117 = tpu.matmul %114, %116, %cst_80 {dimension_numbers = #tpu.dot_dimension_numbers<[1], [0], [0], [1], [0, 0, 1, 1], [], []>} : vector<8x128xf32>, vector<128x128xf32>, vector<8x128xf32> -> vector<8x128xf32>
    %118 = arith.addf %113, %117 : vector<8x128xf32>
    %119 = vector.extract_strided_slice %109 {offsets = [2, 0], sizes = [8, 128], strides = [1, 1]} : vector<10x128xf32> to vector<8x128xf32>
    %c14 = arith.constant 14 : index
    %c0_81 = arith.constant 0 : index
    %c0_82 = arith.constant 0 : index
    %120 = vector.load %arg2[%c14, %c0_81, %c0_82] : memref<18x128x128xf32, #tpu.memory_space<vmem>>, vector<1x128x128xf32>
    %121 = vector.shape_cast %120 : vector<1x128x128xf32> to vector<128x128xf32>
    %cst_83 = arith.constant dense<0.000000e+00> : vector<8x128xf32>
    %122 = tpu.matmul %119, %121, %cst_83 {dimension_numbers = #tpu.dot_dimension_numbers<[1], [0], [0], [1], [0, 0, 1, 1], [], []>} : vector<8x128xf32>, vector<128x128xf32>, vector<8x128xf32> -> vector<8x128xf32>
    %123 = arith.addf %118, %122 : vector<8x128xf32>
    %c4_84 = arith.constant 4 : index
    %c0_85 = arith.constant 0 : index
    %124 = vector.load %arg3[%c4_84, %c0_85] : memref<6x128xf32, #tpu.memory_space<vmem>>, vector<1x128xf32>
    %125 = vector.broadcast %124 : vector<1x128xf32> to vector<8x128xf32>
    %126 = arith.addf %123, %125 : vector<8x128xf32>
    %cst_86 = arith.constant 0.000000e+00 : f32
    %127 = vector.broadcast %cst_86 : f32 to vector<8x128xf32>
    %128 = arith.maximumf %126, %127 : vector<8x128xf32>
    %129 = tpu.concatenate %2, %128, %2 in 0 : vector<1x128xf32>, vector<8x128xf32>, vector<1x128xf32> -> vector<10x128xf32>
    %130 = vector.extract_strided_slice %129 {offsets = [0, 0], sizes = [8, 128], strides = [1, 1]} : vector<10x128xf32> to vector<8x128xf32>
    %c15 = arith.constant 15 : index
    %c0_87 = arith.constant 0 : index
    %c0_88 = arith.constant 0 : index
    %131 = vector.load %arg2[%c15, %c0_87, %c0_88] : memref<18x128x128xf32, #tpu.memory_space<vmem>>, vector<1x128x128xf32>
    %132 = vector.shape_cast %131 : vector<1x128x128xf32> to vector<128x128xf32>
    %cst_89 = arith.constant dense<0.000000e+00> : vector<8x128xf32>
    %133 = tpu.matmul %130, %132, %cst_89 {dimension_numbers = #tpu.dot_dimension_numbers<[1], [0], [0], [1], [0, 0, 1, 1], [], []>} : vector<8x128xf32>, vector<128x128xf32>, vector<8x128xf32> -> vector<8x128xf32>
    %134 = vector.extract_strided_slice %129 {offsets = [1, 0], sizes = [8, 128], strides = [1, 1]} : vector<10x128xf32> to vector<8x128xf32>
    %c16 = arith.constant 16 : index
    %c0_90 = arith.constant 0 : index
    %c0_91 = arith.constant 0 : index
    %135 = vector.load %arg2[%c16, %c0_90, %c0_91] : memref<18x128x128xf32, #tpu.memory_space<vmem>>, vector<1x128x128xf32>
    %136 = vector.shape_cast %135 : vector<1x128x128xf32> to vector<128x128xf32>
    %cst_92 = arith.constant dense<0.000000e+00> : vector<8x128xf32>
    %137 = tpu.matmul %134, %136, %cst_92 {dimension_numbers = #tpu.dot_dimension_numbers<[1], [0], [0], [1], [0, 0, 1, 1], [], []>} : vector<8x128xf32>, vector<128x128xf32>, vector<8x128xf32> -> vector<8x128xf32>
    %138 = arith.addf %133, %137 : vector<8x128xf32>
    %139 = vector.extract_strided_slice %129 {offsets = [2, 0], sizes = [8, 128], strides = [1, 1]} : vector<10x128xf32> to vector<8x128xf32>
    %c17 = arith.constant 17 : index
    %c0_93 = arith.constant 0 : index
    %c0_94 = arith.constant 0 : index
    %140 = vector.load %arg2[%c17, %c0_93, %c0_94] : memref<18x128x128xf32, #tpu.memory_space<vmem>>, vector<1x128x128xf32>
    %141 = vector.shape_cast %140 : vector<1x128x128xf32> to vector<128x128xf32>
    %cst_95 = arith.constant dense<0.000000e+00> : vector<8x128xf32>
    %142 = tpu.matmul %139, %141, %cst_95 {dimension_numbers = #tpu.dot_dimension_numbers<[1], [0], [0], [1], [0, 0, 1, 1], [], []>} : vector<8x128xf32>, vector<128x128xf32>, vector<8x128xf32> -> vector<8x128xf32>
    %143 = arith.addf %138, %142 : vector<8x128xf32>
    %c5_96 = arith.constant 5 : index
    %c0_97 = arith.constant 0 : index
    %144 = vector.load %arg3[%c5_96, %c0_97] : memref<6x128xf32, #tpu.memory_space<vmem>>, vector<1x128xf32>
    %145 = vector.broadcast %144 : vector<1x128xf32> to vector<8x128xf32>
    %146 = arith.addf %143, %145 : vector<8x128xf32>
    %147 = arith.addf %146, %108 : vector<8x128xf32>
    %cst_98 = arith.constant 0.000000e+00 : f32
    %148 = vector.broadcast %cst_98 : f32 to vector<8x128xf32>
    %149 = arith.maximumf %147, %148 : vector<8x128xf32>
    %c5_99 = arith.constant 5 : index
    %c0_100 = arith.constant 0 : index
    %c0_101 = arith.constant 0 : index
    %150 = vector.load %arg4[%c5_99, %c0_100, %c0_101] : memref<9x128x128xf32, #tpu.memory_space<vmem>>, vector<1x128x128xf32>
    %151 = vector.shape_cast %150 : vector<1x128x128xf32> to vector<128x128xf32>
    %cst_102 = arith.constant dense<0.000000e+00> : vector<8x128xf32>
    %152 = tpu.matmul %1, %151, %cst_102 {dimension_numbers = #tpu.dot_dimension_numbers<[1], [0], [0], [1], [0, 0, 1, 1], [], []>} : vector<8x128xf32>, vector<128x128xf32>, vector<8x128xf32> -> vector<8x128xf32>
    %c6_103 = arith.constant 6 : index
    %c0_104 = arith.constant 0 : index
    %c0_105 = arith.constant 0 : index
    %153 = vector.load %arg4[%c6_103, %c0_104, %c0_105] : memref<9x128x128xf32, #tpu.memory_space<vmem>>, vector<1x128x128xf32>
    %154 = vector.shape_cast %153 : vector<1x128x128xf32> to vector<128x128xf32>
    %cst_106 = arith.constant dense<0.000000e+00> : vector<8x128xf32>
    %155 = tpu.matmul %43, %154, %cst_106 {dimension_numbers = #tpu.dot_dimension_numbers<[1], [0], [0], [1], [0, 0, 1, 1], [], []>} : vector<8x128xf32>, vector<128x128xf32>, vector<8x128xf32> -> vector<8x128xf32>
    %156 = arith.addf %152, %155 : vector<8x128xf32>
    %c7_107 = arith.constant 7 : index
    %c0_108 = arith.constant 0 : index
    %c0_109 = arith.constant 0 : index
    %157 = vector.load %arg4[%c7_107, %c0_108, %c0_109] : memref<9x128x128xf32, #tpu.memory_space<vmem>>, vector<1x128x128xf32>
    %158 = vector.shape_cast %157 : vector<1x128x128xf32> to vector<128x128xf32>
    %cst_110 = arith.constant dense<0.000000e+00> : vector<8x128xf32>
    %159 = tpu.matmul %94, %158, %cst_110 {dimension_numbers = #tpu.dot_dimension_numbers<[1], [0], [0], [1], [0, 0, 1, 1], [], []>} : vector<8x128xf32>, vector<128x128xf32>, vector<8x128xf32> -> vector<8x128xf32>
    %160 = arith.addf %156, %159 : vector<8x128xf32>
    %c8_111 = arith.constant 8 : index
    %c0_112 = arith.constant 0 : index
    %c0_113 = arith.constant 0 : index
    %161 = vector.load %arg4[%c8_111, %c0_112, %c0_113] : memref<9x128x128xf32, #tpu.memory_space<vmem>>, vector<1x128x128xf32>
    %162 = vector.shape_cast %161 : vector<1x128x128xf32> to vector<128x128xf32>
    %cst_114 = arith.constant dense<0.000000e+00> : vector<8x128xf32>
    %163 = tpu.matmul %149, %162, %cst_114 {dimension_numbers = #tpu.dot_dimension_numbers<[1], [0], [0], [1], [0, 0, 1, 1], [], []>} : vector<8x128xf32>, vector<128x128xf32>, vector<8x128xf32> -> vector<8x128xf32>
    %164 = arith.addf %160, %163 : vector<8x128xf32>
    %c2_115 = arith.constant 2 : index
    %c0_116 = arith.constant 0 : index
    %165 = vector.load %arg5[%c2_115, %c0_116] : memref<3x128xf32, #tpu.memory_space<vmem>>, vector<1x128xf32>
    %166 = vector.broadcast %165 : vector<1x128xf32> to vector<8x128xf32>
    %167 = arith.addf %164, %166 : vector<8x128xf32>
    %c0_117 = arith.constant 0 : index
    %c0_118 = arith.constant 0 : index
    %c0_119 = arith.constant 0 : index
    %168 = vector.load %arg6[%c0_117, %c0_118, %c0_119] : memref<1x8x128xf32, #tpu.memory_space<vmem>>, vector<1x8x128xf32>
    %169 = vector.shape_cast %168 : vector<1x8x128xf32> to vector<8x128xf32>
    %170 = vector.shape_cast %167 : vector<8x128xf32> to vector<1x8x128xf32>
    tpu.vector_store %arg6[%c0_117, %c0_118, %c0_119], %170 {strides = array<i32>} : memref<1x8x128xf32, #tpu.memory_space<vmem>>, vector<1x8x128xf32>,
    return
  }
  func.func @transform_0(%arg0: i32) -> (i32, i32, i32) {
    %c0_i32 = arith.constant 0 : i32
    %c0_i32_0 = arith.constant 0 : i32
    %c0_i32_1 = arith.constant 0 : i32
    return %arg0, %c0_i32, %c0_i32_0 : i32, i32, i32
  }
  func.func @transform_1(%arg0: i32) -> (i32, i32, i32) {
    %c0_i32 = arith.constant 0 : i32
    %c0_i32_0 = arith.constant 0 : i32
    %c0_i32_1 = arith.constant 0 : i32
    %c0_i32_2 = arith.constant 0 : i32
    return %c0_i32, %c0_i32_0, %c0_i32_1 : i32, i32, i32
  }
  func.func @transform_2(%arg0: i32) -> (i32, i32) {
    %c0_i32 = arith.constant 0 : i32
    %c0_i32_0 = arith.constant 0 : i32
    %c0_i32_1 = arith.constant 0 : i32
    return %c0_i32, %c0_i32_0 : i32, i32
  }
  func.func @transform_3(%arg0: i32) -> (i32, i32, i32) {
    %c0_i32 = arith.constant 0 : i32
    %c0_i32_0 = arith.constant 0 : i32
    %c0_i32_1 = arith.constant 0 : i32
    %c0_i32_2 = arith.constant 0 : i32
    return %c0_i32, %c0_i32_0, %c0_i32_1 : i32, i32, i32
  }
  func.func @transform_4(%arg0: i32) -> (i32, i32) {
    %c0_i32 = arith.constant 0 : i32
    %c0_i32_0 = arith.constant 0 : i32
    %c0_i32_1 = arith.constant 0 : i32
    return %c0_i32, %c0_i32_0 : i32, i32
  }
  func.func @transform_5(%arg0: i32) -> (i32, i32, i32) {
    %c0_i32 = arith.constant 0 : i32
    %c0_i32_0 = arith.constant 0 : i32
    %c0_i32_1 = arith.constant 0 : i32
    return %arg0, %c0_i32, %c0_i32_0 : i32, i32, i32
  }
}

</mosaic_0001>

<llo_original>
// kernel: tile.48
$region0: #{tile.48}
  #allocation0 [shape = 's32[1]{0}', space=sflag, size = 0x4, scoped, tag = 'scoped memory for tile.48']
  %s0 = inlined_call_operand.vmem [shape: f32[4], index: 0, kind: input, shape index: {}]
  %s1 = inlined_call_operand.vmem [shape: f32[32,4], index: 1, kind: output, shape index: {}]
  // Predicated region
  $region2: #{tile.48} parent=0 // pred_check
    _
  $region3: #{tile.48} parent=0 // pred_check_branch
    %3 = sbr.rel (0) target = $region5
  $region4: #{tile.48} parent=0 // pred_region
    _
  $region5: #{tile.48} parent=0 // pred_fallthru
    _
  %v4 = vld [vmem:[%s0] ss:$0 sm:$0xff]
  %5 = vst [vmem:[%s1] sm:$0xff] %v4
  %s6 = scalar_lea.vmem %s1, 8
  %7 = vst [vmem:[%s6] sm:$0xff] %v4
  %s8 = scalar_lea.vmem %s1, 16
  %9 = vst [vmem:[%s8] sm:$0xff] %v4
  %s10 = scalar_lea.vmem %s1, 24
  %11 = vst [vmem:[%s10] sm:$0xff] %v4

// kernel: tile.69
$region0: #{tile.69}
  %s0 = inlined_call_operand.vmem [shape: f32[32,4], index: 0, kind: input, shape index: {}]
  %s1 = inlined_call_operand.vmem [shape: f32[1,128], index: 1, kind: output, shape index: {}]
  $region1: #{tile.69} parent=0
    #allocation0 [shape = 'u8[4096]{0}', space=vmem, size = 0x1000, scoped, tag = 'scoped mem for output reshape']
    %v2 = vld [vmem:[%s0] sm:$0x1]
    %vm3 = vcmask 31744
    %4 = vst.msk [vmem:[#allocation0] sm:$0x1] %vm3, %v2
    %s5 = scalar_lea.vmem %s0, 31
    %v6 = vld [vmem:[%s5] sm:$0x1]
    %7 = vrot.lane.b32.xlu0 %v6, 124
    %v8 = vpop.permute.xlu0 %7
    %vm9 = vcmask 1048544
    %10 = vst.msk [vmem:[#allocation0] sm:$0x1] %vm9, %v8
    %s11 = scalar_lea.vmem %s0, 30
    %v12 = vld [vmem:[%s11] sm:$0x1]
    %13 = vrot.lane.b32.xlu0 %v12, 120
    %v14 = vpop.permute.xlu0 %13
    %vm15 = vcmask 1015744
    %16 = vst.msk [vmem:[#allocation0] sm:$0x1] %vm15, %v14
    %s17 = scalar_lea.vmem %s0, 29
    %v18 = vld [vmem:[%s17] sm:$0x1]
    %19 = vrot.lane.b32.xlu0 %v18, 116
    %v20 = vpop.permute.xlu0 %19
    %vm21 = vcmask 982944
    %22 = vst.msk [vmem:[#allocation0] sm:$0x1] %vm21, %v20
    %s23 = scalar_lea.vmem %s0, 28
    %v24 = vld [vmem:[%s23] sm:$0x1]
    %25 = vrot.lane.b32.xlu0 %v24, 112
    %v26 = vpop.permute.xlu0 %25
    %vm27 = vcmask 950144
    %28 = vst.msk [vmem:[#allocation0] sm:$0x1] %vm27, %v26
    %s29 = scalar_lea.vmem %s0, 27
    %v30 = vld [vmem:[%s29] sm:$0x1]
    %31 = vrot.lane.b32.xlu0 %v30, 108
    %v32 = vpop.permute.xlu0 %31
    %vm33 = vcmask 917344
    %34 = vst.msk [vmem:[#allocation0] sm:$0x1] %vm33, %v32
    %s35 = scalar_lea.vmem %s0, 26
    %v36 = vld [vmem:[%s35] sm:$0x1]
    %37 = vrot.lane.b32.xlu0 %v36, 104
    %v38 = vpop.permute.xlu0 %37
    %vm39 = vcmask 884544
    %40 = vst.msk [vmem:[#allocation0] sm:$0x1] %vm39, %v38
    %s41 = scalar_lea.vmem %s0, 25
    %v42 = vld [vmem:[%s41] sm:$0x1]
    %43 = vrot.lane.b32.xlu0 %v42, 100
    %v44 = vpop.permute.xlu0 %43
    %vm45 = vcmask 851744
    %46 = vst.msk [vmem:[#allocation0] sm:$0x1] %vm45, %v44
    %s47 = scalar_lea.vmem %s0, 24
    %v48 = vld [vmem:[%s47] sm:$0x1]
    %49 = vrot.lane.b32.xlu0 %v48, 96
    %v50 = vpop.permute.xlu0 %49
    %vm51 = vcmask 818944
    %52 = vst.msk [vmem:[#allocation0] sm:$0x1] %vm51, %v50
    %s53 = scalar_lea.vmem %s0, 23
    %v54 = vld [vmem:[%s53] sm:$0x1]
    %55 = vrot.lane.b32.xlu0 %v54, 92
    %v56 = vpop.permute.xlu0 %55
    %vm57 = vcmask 786144
    %58 = vst.msk [vmem:[#allocation0] sm:$0x1] %vm57, %v56
    %s59 = scalar_lea.vmem %s0, 22
    %v60 = vld [vmem:[%s59] sm:$0x1]
    %61 = vrot.lane.b32.xlu0 %v60, 88
    %v62 = vpop.permute.xlu0 %61
    %vm63 = vcmask 753344
    %64 = vst.msk [vmem:[#allocation0] sm:$0x1] %vm63, %v62
    %s65 = scalar_lea.vmem %s0, 21
    %v66 = vld [vmem:[%s65] sm:$0x1]
    %67 = vrot.lane.b32.xlu0 %v66, 84
    %v68 = vpop.permute.xlu0 %67
    %vm69 = vcmask 720544
    %70 = vst.msk [vmem:[#allocation0] sm:$0x1] %vm69, %v68
    %s71 = scalar_lea.vmem %s0, 20
    %v72 = vld [vmem:[%s71] sm:$0x1]
    %73 = vrot.lane.b32.xlu0 %v72, 80
    %v74 = vpop.permute.xlu0 %73
    %vm75 = vcmask 687744
    %76 = vst.msk [vmem:[#allocation0] sm:$0x1] %vm75, %v74
    %s77 = scalar_lea.vmem %s0, 19
    %v78 = vld [vmem:[%s77] sm:$0x1]
    %79 = vrot.lane.b32.xlu0 %v78, 76
    %v80 = vpop.permute.xlu0 %79
    %vm81 = vcmask 654944
    %82 = vst.msk [vmem:[#allocation0] sm:$0x1] %vm81, %v80
    %s83 = scalar_lea.vmem %s0, 18
    %v84 = vld [vmem:[%s83] sm:$0x1]
    %85 = vrot.lane.b32.xlu0 %v84, 72
    %v86 = vpop.permute.xlu0 %85
    %vm87 = vcmask 622144
    %88 = vst.msk [vmem:[#allocation0] sm:$0x1] %vm87, %v86
    %s89 = scalar_lea.vmem %s0, 17
    %v90 = vld [vmem:[%s89] sm:$0x1]
    %91 = vrot.lane.b32.xlu0 %v90, 68
    %v92 = vpop.permute.xlu0 %91
    %vm93 = vcmask 589344
    %94 = vst.msk [vmem:[#allocation0] sm:$0x1] %vm93, %v92
    %s95 = scalar_lea.vmem %s0, 16
    %v96 = vld [vmem:[%s95] sm:$0x1]
    %97 = vrot.lane.b32.xlu0 %v96, 64
    %v98 = vpop.permute.xlu0 %97
    %vm99 = vcmask 556544
    %100 = vst.msk [vmem:[#allocation0] sm:$0x1] %vm99, %v98
    %s101 = scalar_lea.vmem %s0, 15
    %v102 = vld [vmem:[%s101] sm:$0x1]
    %103 = vrot.lane.b32.xlu0 %v102, 60
    %v104 = vpop.permute.xlu0 %103
    %vm105 = vcmask 523744
    %106 = vst.msk [vmem:[#allocation0] sm:$0x1] %vm105, %v104
    %s107 = scalar_lea.vmem %s0, 14
    %v108 = vld [vmem:[%s107] sm:$0x1]
    %109 = vrot.lane.b32.xlu0 %v108, 56
    %v110 = vpop.permute.xlu0 %109
    %vm111 = vcmask 490944
    %112 = vst.msk [vmem:[#allocation0] sm:$0x1] %vm111, %v110
    %s113 = scalar_lea.vmem %s0, 13
    %v114 = vld [vmem:[%s113] sm:$0x1]
    %115 = vrot.lane.b32.xlu0 %v114, 52
    %v116 = vpop.permute.xlu0 %115
    %vm117 = vcmask 458144
    %118 = vst.msk [vmem:[#allocation0] sm:$0x1] %vm117, %v116
    %s119 = scalar_lea.vmem %s0, 12
    %v120 = vld [vmem:[%s119] sm:$0x1]
    %121 = vrot.lane.b32.xlu0 %v120, 48
    %v122 = vpop.permute.xlu0 %121
    %vm123 = vcmask 425344
    %124 = vst.msk [vmem:[#allocation0] sm:$0x1] %vm123, %v122
    %s125 = scalar_lea.vmem %s0, 11
    %v126 = vld [vmem:[%s125] sm:$0x1]
    %127 = vrot.lane.b32.xlu0 %v126, 44
    %v128 = vpop.permute.xlu0 %127
    %vm129 = vcmask 392544
    %130 = vst.msk [vmem:[#allocation0] sm:$0x1] %vm129, %v128
    %s131 = scalar_lea.vmem %s0, 10
    %v132 = vld [vmem:[%s131] sm:$0x1]
    %133 = vrot.lane.b32.xlu0 %v132, 40
    %v134 = vpop.permute.xlu0 %133
    %vm135 = vcmask 359744
    %136 = vst.msk [vmem:[#allocation0] sm:$0x1] %vm135, %v134
    %s137 = scalar_lea.vmem %s0, 9
    %v138 = vld [vmem:[%s137] sm:$0x1]
    %139 = vrot.lane.b32.xlu0 %v138, 36
    %v140 = vpop.permute.xlu0 %139
    %vm141 = vcmask 326944
    %142 = vst.msk [vmem:[#allocation0] sm:$0x1] %vm141, %v140
    %s143 = scalar_lea.vmem %s0, 8
    %v144 = vld [vmem:[%s143] sm:$0x1]
    %145 = vrot.lane.b32.xlu0 %v144, 32
    %v146 = vpop.permute.xlu0 %145
    %vm147 = vcmask 294144
    %148 = vst.msk [vmem:[#allocation0] sm:$0x1] %vm147, %v146
    %s149 = scalar_lea.vmem %s0, 7
    %v150 = vld [vmem:[%s149] sm:$0x1]
    %151 = vrot.lane.b32.xlu0 %v150, 28
    %v152 = vpop.permute.xlu0 %151
    %vm153 = vcmask 261344
    %154 = vst.msk [vmem:[#allocation0] sm:$0x1] %vm153, %v152
    %s155 = scalar_lea.vmem %s0, 6
    %v156 = vld [vmem:[%s155] sm:$0x1]
    %157 = vrot.lane.b32.xlu0 %v156, 24
    %v158 = vpop.permute.xlu0 %157
    %vm159 = vcmask 228544
    %160 = vst.msk [vmem:[#allocation0] sm:$0x1] %vm159, %v158
    %s161 = scalar_lea.vmem %s0, 5
    %v162 = vld [vmem:[%s161] sm:$0x1]
    %163 = vrot.lane.b32.xlu0 %v162, 20
    %v164 = vpop.permute.xlu0 %163
    %vm165 = vcmask 195744
    %166 = vst.msk [vmem:[#allocation0] sm:$0x1] %vm165, %v164
    %s167 = scalar_lea.vmem %s0, 4
    %v168 = vld [vmem:[%s167] sm:$0x1]
    %169 = vrot.lane.b32.xlu0 %v168, 16
    %v170 = vpop.permute.xlu0 %169
    %vm171 = vcmask 162944
    %172 = vst.msk [vmem:[#allocation0] sm:$0x1] %vm171, %v170
    %s173 = scalar_lea.vmem %s0, 3
    %v174 = vld [vmem:[%s173] sm:$0x1]
    %175 = vrot.lane.b32.xlu0 %v174, 12
    %v176 = vpop.permute.xlu0 %175
    %vm177 = vcmask 130144
    %178 = vst.msk [vmem:[#allocation0] sm:$0x1] %vm177, %v176
    %s179 = scalar_lea.vmem %s0, 2
    %v180 = vld [vmem:[%s179] sm:$0x1]
    %181 = vrot.lane.b32.xlu0 %v180, 8
    %v182 = vpop.permute.xlu0 %181
    %vm183 = vcmask 97344
    %184 = vst.msk [vmem:[#allocation0] sm:$0x1] %vm183, %v182
    %s185 = scalar_lea.vmem %s0, 1
    %v186 = vld [vmem:[%s185] sm:$0x1]
    %187 = vrot.lane.b32.xlu0 %v186, 4
    %v188 = vpop.permute.xlu0 %187
    %vm189 = vcmask 64544
    %190 = vst.msk [vmem:[#allocation0] sm:$0x1] %vm189, %v188
    %s192 = ssub.s32 2, 1
    %v193 = vld [vmem:[#allocation0] sm:%s192]
    %s195 = ssub.s32 2, 1
    %196 = vst [vmem:[%s1] sm:%s195] %v193

// kernel: cascading_block.1
$region0: #{cascading_block.1}
  #allocation0 [shape = 'u32[]', space=smem, size = 0x4, offset = 0x4, fixed_abs, tag = 'smem constant byte address 0x4 - core index']
  #allocation1 [shape = 'u32[72,128]{1,0:T(1,128)}', space=vmem, size = 0x9000, scoped, tag = 'internal scratch']
  %s0 = inlined_call_operand.vmem [shape: f32[2,8,128], index: 0, kind: input, shape index: {}]
  %s1 = inlined_call_operand.vmem [shape: f32[18,128,128], index: 1, kind: input, shape index: {}]
  %s2 = inlined_call_operand.vmem [shape: f32[6,128], index: 2, kind: input, shape index: {}]
  %s3 = inlined_call_operand.vmem [shape: f32[9,128,128], index: 3, kind: input, shape index: {}]
  %s4 = inlined_call_operand.vmem [shape: f32[3,128], index: 4, kind: input, shape index: {}]
  %s5 = inlined_call_operand.vmem [shape: f32[2,8,128], index: 5, kind: output, shape index: {}]
  %s6 = sld [smem:[#allocation0]]
  $region53: #{cascading_block.1} parent=0
    _
  %s8 = ssub.s32 1, %s6
  %s9 = scalar_select 0, %s8, %s6
  loop: start=0, step=1, limit=4
  $region2: #{cascading_block.1} parent=0 // loop_pre_header
    _
  $region3: #{cascading_block.1} parent=0 // loop_header
    %s11 = sphi 0, %s15
    %p12 = scmp.ge.s32.totalorder %s11, 4
    %s21 = sphi 0, %s23
    %s24 = sphi 0, %s21
    %s25 = sphi 0, %s24
    %s41 = sphi 0, %s25
    %s45 = sphi 0, %s45
    %s47 = sphi 0, %s45
    %s48 = sphi 0, %s47
    %s62 = sphi 0, %s48
    %s66 = sphi 0, %s66
    %s68 = sphi 0, %s66
    %s69 = sphi 0, %s68
    %s83 = sphi 0, %s69
    %s87 = sphi 0, %s87
    %s89 = sphi 0, %s87
    %s90 = sphi 0, %s89
    %s104 = sphi 0, %s90
    %s108 = sphi 0, %s108
    %s110 = sphi 0, %s108
    %s111 = sphi 0, %s110
    %s125 = sphi 0, %s111
    %s131 = sphi 0, %s133
    %s134 = sphi 0, %s131
    %s135 = sphi 0, %s134
    %s151 = sphi 0, %s135
  $region4: #{cascading_block.1} parent=0 // loop_header_branch
    %14 = sbr.rel (%p12) target = $region8
  $region5: #{cascading_block.1} parent=0 // loop_body
    %s16 = ssub.s32 %s11, 1
    %s17 = ssub.s32 %s11, 2
    %s18 = sadd.s32 %s11, 1
    %s19 = ssub.s32 %s11, %s18
    %p20 = scmp.eq.s32.totalorder %s19, 0
    %s22 = sadd.s32 %s21, 1
    %s23 = scalar_select %p20, %s21, %s22
    %p26 = pneg %p20
    %p27 = scmp.eq.s32.totalorder %s11, 1
    %p28 = por %p26, %p27
    %p29 = scmp.ne.s32.totalorder %s21, %s24
    %p30 = scmp.eq.s32.totalorder %s11, 0
    %p31 = por %p29, %p30
    %p32 = scmp.ne.s32.totalorder %s21, %s24
    %p33 = scmp.eq.s32.totalorder %s16, 1
    %p34 = por %p32, %p33
    %p35 = scmp.ne.s32.totalorder %s24, %s25
    %p36 = scmp.eq.s32.totalorder %s16, 0
    %p37 = por %p35, %p36
    %p38 = scmp.ne.s32.totalorder %s24, %s25
    %p39 = scmp.eq.s32.totalorder %s17, 1
    %p40 = por %p38, %p39
    %p42 = scmp.ne.s32.totalorder %s25, %s41
    %p43 = scmp.eq.s32.totalorder %s17, 0
    %p44 = por %p42, %p43
    %s46 = sadd.s32 %s45, 1
    %p49 = scmp.eq.s32.totalorder %s11, 1
    %p50 = scmp.ne.s32.totalorder %s45, %s47
    %p51 = scmp.eq.s32.totalorder %s11, 0
    %p52 = por %p50, %p51
    %p53 = scmp.ne.s32.totalorder %s45, %s47
    %p54 = scmp.eq.s32.totalorder %s16, 1
    %p55 = por %p53, %p54
    %p56 = scmp.ne.s32.totalorder %s47, %s48
    %p57 = scmp.eq.s32.totalorder %s16, 0
    %p58 = por %p56, %p57
    %p59 = scmp.ne.s32.totalorder %s47, %s48
    %p60 = scmp.eq.s32.totalorder %s17, 1
    %p61 = por %p59, %p60
    %p63 = scmp.ne.s32.totalorder %s48, %s62
    %p64 = scmp.eq.s32.totalorder %s17, 0
    %p65 = por %p63, %p64
    %s67 = sadd.s32 %s66, 1
    %p70 = scmp.eq.s32.totalorder %s11, 1
    %p71 = scmp.ne.s32.totalorder %s66, %s68
    %p72 = scmp.eq.s32.totalorder %s11, 0
    %p73 = por %p71, %p72
    %p74 = scmp.ne.s32.totalorder %s66, %s68
    %p75 = scmp.eq.s32.totalorder %s16, 1
    %p76 = por %p74, %p75
    %p77 = scmp.ne.s32.totalorder %s68, %s69
    %p78 = scmp.eq.s32.totalorder %s16, 0
    %p79 = por %p77, %p78
    %p80 = scmp.ne.s32.totalorder %s68, %s69
    %p81 = scmp.eq.s32.totalorder %s17, 1
    %p82 = por %p80, %p81
    %p84 = scmp.ne.s32.totalorder %s69, %s83
    %p85 = scmp.eq.s32.totalorder %s17, 0
    %p86 = por %p84, %p85
    %s88 = sadd.s32 %s87, 1
    %p91 = scmp.eq.s32.totalorder %s11, 1
    %p92 = scmp.ne.s32.totalorder %s87, %s89
    %p93 = scmp.eq.s32.totalorder %s11, 0
    %p94 = por %p92, %p93
    %p95 = scmp.ne.s32.totalorder %s87, %s89
    %p96 = scmp.eq.s32.totalorder %s16, 1
    %p97 = por %p95, %p96
    %p98 = scmp.ne.s32.totalorder %s89, %s90
    %p99 = scmp.eq.s32.totalorder %s16, 0
    %p100 = por %p98, %p99
    %p101 = scmp.ne.s32.totalorder %s89, %s90
    %p102 = scmp.eq.s32.totalorder %s17, 1
    %p103 = por %p101, %p102
    %p105 = scmp.ne.s32.totalorder %s90, %s104
    %p106 = scmp.eq.s32.totalorder %s17, 0
    %p107 = por %p105, %p106
    %s109 = sadd.s32 %s108, 1
    %p112 = scmp.eq.s32.totalorder %s11, 1
    %p113 = scmp.ne.s32.totalorder %s108, %s110
    %p114 = scmp.eq.s32.totalorder %s11, 0
    %p115 = por %p113, %p114
    %p116 = scmp.ne.s32.totalorder %s108, %s110
    %p117 = scmp.eq.s32.totalorder %s16, 1
    %p118 = por %p116, %p117
    %p119 = scmp.ne.s32.totalorder %s110, %s111
    %p120 = scmp.eq.s32.totalorder %s16, 0
    %p121 = por %p119, %p120
    %p122 = scmp.ne.s32.totalorder %s110, %s111
    %p123 = scmp.eq.s32.totalorder %s17, 1
    %p124 = por %p122, %p123
    %p126 = scmp.ne.s32.totalorder %s111, %s125
    %p127 = scmp.eq.s32.totalorder %s17, 0
    %p128 = por %p126, %p127
    %s129 = ssub.s32 %s11, %s18
    %p130 = scmp.eq.s32.totalorder %s129, 0
    %s132 = sadd.s32 %s131, 1
    %s133 = scalar_select %p130, %s131, %s132
    %p136 = pneg %p130
    %p137 = scmp.eq.s32.totalorder %s11, 1
    %p138 = por %p136, %p137
    %p139 = scmp.ne.s32.totalorder %s131, %s134
    %p140 = scmp.eq.s32.totalorder %s11, 0
    %p141 = por %p139, %p140
    %p142 = scmp.ne.s32.totalorder %s131, %s134
    %p143 = scmp.eq.s32.totalorder %s16, 1
    %p144 = por %p142, %p143
    %p145 = scmp.ne.s32.totalorder %s134, %s135
    %p146 = scmp.eq.s32.totalorder %s16, 0
    %p147 = por %p145, %p146
    %p148 = scmp.ne.s32.totalorder %s134, %s135
    %p149 = scmp.eq.s32.totalorder %s17, 1
    %p150 = por %p148, %p149
    %p152 = scmp.ne.s32.totalorder %s135, %s151
    %p153 = scmp.eq.s32.totalorder %s17, 0
    %p154 = por %p152, %p153
    %p155 = scmp.le.s32.totalorder 1, %s11
    %p156 = scmp.lt.s32.totalorder %s11, 3
    %p157 = pnand %p155, %p156
    %p158 = pneg %p157
    // Predicated region
    $region9: #{cascading_block.1} parent=5 // pred_check
      _
    $region10: #{cascading_block.1} parent=5 // pred_check_branch
      %160 = sbr.rel (%p157) target = $region12
    $region11: #{cascading_block.1} parent=5 // pred_region
      %s161 = ssub.s32 %s11, 1
      // Predicated region
      $region13: #{cascading_block.1} parent=11 // pred_check
        %p162 = pneg %p58
      $region14: #{cascading_block.1} parent=11 // pred_check_branch
        %164 = sbr.rel (%p162) target = $region16
      $region15: #{cascading_block.1} parent=11 // pred_region
        _
      $region16: #{cascading_block.1} parent=11 // pred_fallthru
        _
      // Predicated region
      $region17: #{cascading_block.1} parent=11 // pred_check
        %p165 = pneg %p79
      $region18: #{cascading_block.1} parent=11 // pred_check_branch
        %167 = sbr.rel (%p165) target = $region20
      $region19: #{cascading_block.1} parent=11 // pred_region
        _
      $region20: #{cascading_block.1} parent=11 // pred_fallthru
        _
      // Predicated region
      $region21: #{cascading_block.1} parent=11 // pred_check
        %p168 = pneg %p100
      $region22: #{cascading_block.1} parent=11 // pred_check_branch
        %170 = sbr.rel (%p168) target = $region24
      $region23: #{cascading_block.1} parent=11 // pred_region
        _
      $region24: #{cascading_block.1} parent=11 // pred_fallthru
        _
      // Predicated region
      $region25: #{cascading_block.1} parent=11 // pred_check
        %p171 = pneg %p121
      $region26: #{cascading_block.1} parent=11 // pred_check_branch
        %173 = sbr.rel (%p171) target = $region28
      $region27: #{cascading_block.1} parent=11 // pred_region
        _
      $region28: #{cascading_block.1} parent=11 // pred_fallthru
        _
    $region12: #{cascading_block.1} parent=5 // pred_fallthru
      _
    %p174 = scmp.lt.s32.totalorder %s11, 2
    // Predicated region
    $region29: #{cascading_block.1} parent=5 // pred_check
      %p175 = pneg %p174
    $region30: #{cascading_block.1} parent=5 // pred_check_branch
      %177 = sbr.rel (%p175) target = $region32
    $region31: #{cascading_block.1} parent=5 // pred_region
      // Predicated region
      $region33: #{cascading_block.1} parent=31 // pred_check
        %p178 = pneg %p31
      $region34: #{cascading_block.1} parent=31 // pred_check_branch
        %180 = sbr.rel (%p178) target = $region36
      $region35: #{cascading_block.1} parent=31 // pred_region
        %p181 = scmp.lt.s32.totalorder %s11, 1
        %s182 = scalar_select %p181, %s11, 1
        %s183 = smul.addr %s182, 8
        %s184 = scalar_lea.vmem %s0, %s183
      $region36: #{cascading_block.1} parent=31 // pred_fallthru
        _
    $region32: #{cascading_block.1} parent=5 // pred_fallthru
      _
    %p185 = scmp.le.s32.totalorder 1, %s11
    %p186 = scmp.lt.s32.totalorder %s11, 3
    %p187 = pnand %p185, %p186
    %p188 = pneg %p187
    // Predicated region
    $region37: #{cascading_block.1} parent=5 // pred_check
      _
    $region38: #{cascading_block.1} parent=5 // pred_check_branch
      %190 = sbr.rel (%p187) target = $region40
    $region39: #{cascading_block.1} parent=5 // pred_region
      %s191 = ssub.s32 %s11, 1
      %p192 = scmp.lt.s32.totalorder %s16, 1
      %s193 = scalar_select %p192, %s16, 1
      %s194 = smul.addr %s193, 8
      %s195 = scalar_lea.vmem %s0, %s194
      %p196 = pneg %p37
      %p197 = pneg %p34
      %p198 = pneg %p58
      %p199 = pneg %p55
      %p200 = pneg %p79
      %p201 = pneg %p76
      %p202 = pneg %p100
      %p203 = pneg %p97
      %p204 = pneg %p121
      %p205 = pneg %p118
      %p206 = pneg %p147
      %p207 = pneg %p144
      %p208 = scmp.lt.s32.totalorder %s16, 1
      %s209 = scalar_select %p208, %s16, 1
      %s210 = smul.addr %s209, 8
      %s211 = scalar_lea.vmem %s5, %s210
      %p212 = scmp.lt.s32.totalorder %s16, 1
      %s213 = scalar_select %p212, %s16, 1
      %s214 = smul.addr %s213, 8
      %s215 = scalar_lea.vmem %s0, %s214
      %p216 = scmp.lt.s32.totalorder %s16, 1
      %s217 = scalar_select %p216, %s16, 1
      %s218 = smul.addr %s217, 8
      %s219 = scalar_lea.vmem %s5, %s218
      %v220 = vld [vmem:[%s215] sm:$0xff]
      %v222 = vrot.slane %v220, 7
      %vm224 = vcmask 1040384
      %v225 = vsel %vm224, 0.0, %v222
      %v226 = vsel %vm224, %v222, 0.0
      %v227 = vld [vmem:[%s1] sm:$0xff]
      %v228 = vld [vmem:[%s1 + $0x8] sm:$0xff]
      %v229 = vld [vmem:[%s1 + $0x10] sm:$0xff]
      %v230 = vld [vmem:[%s1 + $0x18] sm:$0xff]
      %v231 = vld [vmem:[%s1 + $0x20] sm:$0xff]
      %v232 = vld [vmem:[%s1 + $0x28] sm:$0xff]
      %v233 = vld [vmem:[%s1 + $0x30] sm:$0xff]
      %v234 = vld [vmem:[%s1 + $0x38] sm:$0xff]
      %v235 = vld [vmem:[%s1 + $0x40] sm:$0xff]
      %v236 = vld [vmem:[%s1 + $0x48] sm:$0xff]
      %v237 = vld [vmem:[%s1 + $0x50] sm:$0xff]
      %v238 = vld [vmem:[%s1 + $0x58] sm:$0xff]
      %v239 = vld [vmem:[%s1 + $0x60] sm:$0xff]
      %v240 = vld [vmem:[%s1 + $0x68] sm:$0xff]
      %v241 = vld [vmem:[%s1 + $0x70] sm:$0xff]
      %v242 = vld [vmem:[%s1 + $0x78] sm:$0xff]
      %s243 = scalar_lea.vmem %s1, 128
      %v244 = vld [vmem:[%s243] sm:$0xff]
      %v245 = vld [vmem:[%s243 + $0x8] sm:$0xff]
      %v246 = vld [vmem:[%s243 + $0x10] sm:$0xff]
      %v247 = vld [vmem:[%s243 + $0x18] sm:$0xff]
      %v248 = vld [vmem:[%s243 + $0x20] sm:$0xff]
      %v249 = vld [vmem:[%s243 + $0x28] sm:$0xff]
      %v250 = vld [vmem:[%s243 + $0x30] sm:$0xff]
      %v251 = vld [vmem:[%s243 + $0x38] sm:$0xff]
      %v252 = vld [vmem:[%s243 + $0x40] sm:$0xff]
      %v253 = vld [vmem:[%s243 + $0x48] sm:$0xff]
      %v254 = vld [vmem:[%s243 + $0x50] sm:$0xff]
      %v255 = vld [vmem:[%s243 + $0x58] sm:$0xff]
      %v256 = vld [vmem:[%s243 + $0x60] sm:$0xff]
      %v257 = vld [vmem:[%s243 + $0x68] sm:$0xff]
      %v258 = vld [vmem:[%s243 + $0x70] sm:$0xff]
      %v259 = vld [vmem:[%s243 + $0x78] sm:$0xff]
      %vm262 = vcmask 1046528
      %v263 = vrot.slane %v225, 1
      %v264 = vrot.slane %v226, 1
      %v265 = vsel %vm262, %v263, %v264
      %267 = vmatpush.msra.mxu0 %v259
      %268 = vmatpush.msra.mxu0 %v258
      %269 = vmatpush.msra.mxu0 %v257
      %270 = vmatpush.msra.mxu0 %v256
      %271 = vmatpush.msra.mxu0 %v255
      %272 = vmatpush.msra.mxu0 %v254
      %273 = vmatpush.msra.mxu0 %v253
      %274 = vmatpush.msra.mxu0 %v252
      %275 = vmatpush.msra.mxu0 %v251
      %276 = vmatpush.msra.mxu0 %v250
      %277 = vmatpush.msra.mxu0 %v249
      %278 = vmatpush.msra.mxu0 %v248
      %279 = vmatpush.msra.mxu0 %v247
      %280 = vmatpush.msra.mxu0 %v246
      %281 = vmatpush.msra.mxu0 %v245
      %282 = vmatpush.msra.mxu0 %v244
      %283 = vmatmul.f32.gmra.mxu0 %v265
      %v284 = vpop.f32.mrf.mxu0
      %v285 = vadd.f32 0.0, %v284
      %286 = vdwg.mxu0
      %287 = vmatpush.msra.mxu0 %v242
      %288 = vmatpush.msra.mxu0 %v241
      %289 = vmatpush.msra.mxu0 %v240
      %290 = vmatpush.msra.mxu0 %v239
      %291 = vmatpush.msra.mxu0 %v238
      %292 = vmatpush.msra.mxu0 %v237
      %293 = vmatpush.msra.mxu0 %v236
      %294 = vmatpush.msra.mxu0 %v235
      %295 = vmatpush.msra.mxu0 %v234
      %296 = vmatpush.msra.mxu0 %v233
      %297 = vmatpush.msra.mxu0 %v232
      %298 = vmatpush.msra.mxu0 %v231
      %299 = vmatpush.msra.mxu0 %v230
      %300 = vmatpush.msra.mxu0 %v229
      %301 = vmatpush.msra.mxu0 %v228
      %302 = vmatpush.msra.mxu0 %v227
      %303 = vmatmul.f32.gmra.mxu0 %v225
      %v304 = vpop.f32.mrf.mxu0
      %v305 = vadd.f32 %v285, %v304
      %306 = vdwg.mxu0
      %s307 = scalar_lea.vmem %s1, 256
      %v308 = vld [vmem:[%s307] sm:$0xff]
      %v309 = vld [vmem:[%s307 + $0x8] sm:$0xff]
      %v310 = vld [vmem:[%s307 + $0x10] sm:$0xff]
      %v311 = vld [vmem:[%s307 + $0x18] sm:$0xff]
      %v312 = vld [vmem:[%s307 + $0x20] sm:$0xff]
      %v313 = vld [vmem:[%s307 + $0x28] sm:$0xff]
      %v314 = vld [vmem:[%s307 + $0x30] sm:$0xff]
      %v315 = vld [vmem:[%s307 + $0x38] sm:$0xff]
      %v316 = vld [vmem:[%s307 + $0x40] sm:$0xff]
      %v317 = vld [vmem:[%s307 + $0x48] sm:$0xff]
      %v318 = vld [vmem:[%s307 + $0x50] sm:$0xff]
      %v319 = vld [vmem:[%s307 + $0x58] sm:$0xff]
      %v320 = vld [vmem:[%s307 + $0x60] sm:$0xff]
      %v321 = vld [vmem:[%s307 + $0x68] sm:$0xff]
      %v322 = vld [vmem:[%s307 + $0x70] sm:$0xff]
      %v323 = vld [vmem:[%s307 + $0x78] sm:$0xff]
      %vm324 = vcmask 1045504
      %v325 = vrot.slane %v225, 2
      %v326 = vrot.slane %v226, 2
      %v327 = vsel %vm324, %v325, %v326
      %329 = vmatpush.msra.mxu0 %v323
      %330 = vmatpush.msra.mxu0 %v322
      %331 = vmatpush.msra.mxu0 %v321
      %332 = vmatpush.msra.mxu0 %v320
      %333 = vmatpush.msra.mxu0 %v319
      %334 = vmatpush.msra.mxu0 %v318
      %335 = vmatpush.msra.mxu0 %v317
      %336 = vmatpush.msra.mxu0 %v316
      %337 = vmatpush.msra.mxu0 %v315
      %338 = vmatpush.msra.mxu0 %v314
      %339 = vmatpush.msra.mxu0 %v313
      %340 = vmatpush.msra.mxu0 %v312
      %341 = vmatpush.msra.mxu0 %v311
      %342 = vmatpush.msra.mxu0 %v310
      %343 = vmatpush.msra.mxu0 %v309
      %344 = vmatpush.msra.mxu0 %v308
      %345 = vmatmul.f32.gmra.mxu0 %v327
      %v346 = vpop.f32.mrf.mxu0
      %v347 = vadd.f32 0.0, %v346
      %348 = vdwg.mxu0
      %v349 = vadd.f32 %v305, %v347
      %v350 = vld [vmem:[%s2] sm:$0x1]
      %v351 = vperm.slane %v350, 0
      %v352 = vadd.f32 %v349, %v351
      %v353 = vmax.f32 %v352, 0.0
      %v355 = vrot.slane %v353, 7
      %v357 = vsel %vm224, 0.0, %v355
      %v358 = vsel %vm224, %v355, 0.0
      %s359 = scalar_lea.vmem %s1, 384
      %v360 = vld [vmem:[%s359] sm:$0xff]
      %v361 = vld [vmem:[%s359 + $0x8] sm:$0xff]
      %v362 = vld [vmem:[%s359 + $0x10] sm:$0xff]
      %v363 = vld [vmem:[%s359 + $0x18] sm:$0xff]
      %v364 = vld [vmem:[%s359 + $0x20] sm:$0xff]
      %v365 = vld [vmem:[%s359 + $0x28] sm:$0xff]
      %v366 = vld [vmem:[%s359 + $0x30] sm:$0xff]
      %v367 = vld [vmem:[%s359 + $0x38] sm:$0xff]
      %v368 = vld [vmem:[%s359 + $0x40] sm:$0xff]
      %v369 = vld [vmem:[%s359 + $0x48] sm:$0xff]
      %v370 = vld [vmem:[%s359 + $0x50] sm:$0xff]
      %v371 = vld [vmem:[%s359 + $0x58] sm:$0xff]
      %v372 = vld [vmem:[%s359 + $0x60] sm:$0xff]
      %v373 = vld [vmem:[%s359 + $0x68] sm:$0xff]
      %v374 = vld [vmem:[%s359 + $0x70] sm:$0xff]
      %v375 = vld [vmem:[%s359 + $0x78] sm:$0xff]
      %s376 = scalar_lea.vmem %s1, 512
      %v377 = vld [vmem:[%s376] sm:$0xff]
      %v378 = vld [vmem:[%s376 + $0x8] sm:$0xff]
      %v379 = vld [vmem:[%s376 + $0x10] sm:$0xff]
      %v380 = vld [vmem:[%s376 + $0x18] sm:$0xff]
      %v381 = vld [vmem:[%s376 + $0x20] sm:$0xff]
      %v382 = vld [vmem:[%s376 + $0x28] sm:$0xff]
      %v383 = vld [vmem:[%s376 + $0x30] sm:$0xff]
      %v384 = vld [vmem:[%s376 + $0x38] sm:$0xff]
      %v385 = vld [vmem:[%s376 + $0x40] sm:$0xff]
      %v386 = vld [vmem:[%s376 + $0x48] sm:$0xff]
      %v387 = vld [vmem:[%s376 + $0x50] sm:$0xff]
      %v388 = vld [vmem:[%s376 + $0x58] sm:$0xff]
      %v389 = vld [vmem:[%s376 + $0x60] sm:$0xff]
      %v390 = vld [vmem:[%s376 + $0x68] sm:$0xff]
      %v391 = vld [vmem:[%s376 + $0x70] sm:$0xff]
      %v392 = vld [vmem:[%s376 + $0x78] sm:$0xff]
      %v395 = vrot.slane %v357, 1
      %v396 = vrot.slane %v358, 1
      %v397 = vsel %vm262, %v395, %v396
      %399 = vmatpush.msra.mxu0 %v392
      %400 = vmatpush.msra.mxu0 %v391
      %401 = vmatpush.msra.mxu0 %v390
      %402 = vmatpush.msra.mxu0 %v389
      %403 = vmatpush.msra.mxu0 %v388
      %404 = vmatpush.msra.mxu0 %v387
      %405 = vmatpush.msra.mxu0 %v386
      %406 = vmatpush.msra.mxu0 %v385
      %407 = vmatpush.msra.mxu0 %v384
      %408 = vmatpush.msra.mxu0 %v383
      %409 = vmatpush.msra.mxu0 %v382
      %410 = vmatpush.msra.mxu0 %v381
      %411 = vmatpush.msra.mxu0 %v380
      %412 = vmatpush.msra.mxu0 %v379
      %413 = vmatpush.msra.mxu0 %v378
      %414 = vmatpush.msra.mxu0 %v377
      %415 = vmatmul.f32.gmra.mxu0 %v397
      %v416 = vpop.f32.mrf.mxu0
      %v417 = vadd.f32 0.0, %v416
      %418 = vdwg.mxu0
      %419 = vmatpush.msra.mxu0 %v375
      %420 = vmatpush.msra.mxu0 %v374
      %421 = vmatpush.msra.mxu0 %v373
      %422 = vmatpush.msra.mxu0 %v372
      %423 = vmatpush.msra.mxu0 %v371
      %424 = vmatpush.msra.mxu0 %v370
      %425 = vmatpush.msra.mxu0 %v369
      %426 = vmatpush.msra.mxu0 %v368
      %427 = vmatpush.msra.mxu0 %v367
      %428 = vmatpush.msra.mxu0 %v366
      %429 = vmatpush.msra.mxu0 %v365
      %430 = vmatpush.msra.mxu0 %v364
      %431 = vmatpush.msra.mxu0 %v363
      %432 = vmatpush.msra.mxu0 %v362
      %433 = vmatpush.msra.mxu0 %v361
      %434 = vmatpush.msra.mxu0 %v360
      %435 = vmatmul.f32.gmra.mxu0 %v357
      %v436 = vpop.f32.mrf.mxu0
      %v437 = vadd.f32 %v417, %v436
      %438 = vdwg.mxu0
      %s439 = scalar_lea.vmem %s1, 640
      %v440 = vld [vmem:[%s439] sm:$0xff]
      %v441 = vld [vmem:[%s439 + $0x8] sm:$0xff]
      %v442 = vld [vmem:[%s439 + $0x10] sm:$0xff]
      %v443 = vld [vmem:[%s439 + $0x18] sm:$0xff]
      %v444 = vld [vmem:[%s439 + $0x20] sm:$0xff]
      %v445 = vld [vmem:[%s439 + $0x28] sm:$0xff]
      %v446 = vld [vmem:[%s439 + $0x30] sm:$0xff]
      %v447 = vld [vmem:[%s439 + $0x38] sm:$0xff]
      %v448 = vld [vmem:[%s439 + $0x40] sm:$0xff]
      %v449 = vld [vmem:[%s439 + $0x48] sm:$0xff]
      %v450 = vld [vmem:[%s439 + $0x50] sm:$0xff]
      %v451 = vld [vmem:[%s439 + $0x58] sm:$0xff]
      %v452 = vld [vmem:[%s439 + $0x60] sm:$0xff]
      %v453 = vld [vmem:[%s439 + $0x68] sm:$0xff]
      %v454 = vld [vmem:[%s439 + $0x70] sm:$0xff]
      %v455 = vld [vmem:[%s439 + $0x78] sm:$0xff]
      %v456 = vrot.slane %v357, 2
      %v457 = vrot.slane %v358, 2
      %v458 = vsel %vm324, %v456, %v457
      %460 = vmatpush.msra.mxu0 %v455
      %461 = vmatpush.msra.mxu0 %v454
      %462 = vmatpush.msra.mxu0 %v453
      %463 = vmatpush.msra.mxu0 %v452
      %464 = vmatpush.msra.mxu0 %v451
      %465 = vmatpush.msra.mxu0 %v450
      %466 = vmatpush.msra.mxu0 %v449
      %467 = vmatpush.msra.mxu0 %v448
      %468 = vmatpush.msra.mxu0 %v447
      %469 = vmatpush.msra.mxu0 %v446
      %470 = vmatpush.msra.mxu0 %v445
      %471 = vmatpush.msra.mxu0 %v444
      %472 = vmatpush.msra.mxu0 %v443
      %473 = vmatpush.msra.mxu0 %v442
      %474 = vmatpush.msra.mxu0 %v441
      %475 = vmatpush.msra.mxu0 %v440
      %476 = vmatmul.f32.gmra.mxu0 %v458
      %v477 = vpop.f32.mrf.mxu0
      %v478 = vadd.f32 0.0, %v477
      %479 = vdwg.mxu0
      %v480 = vadd.f32 %v437, %v478
      %v481 = vld [vmem:[%s2 + $0x1] sm:$0x1]
      %v482 = vperm.slane %v481, 0
      %v483 = vadd.f32 %v480, %v482
      %v484 = vadd.f32 %v483, %v220
      %v485 = vmax.f32 %v484, 0.0
      %v486 = vld [vmem:[%s3] sm:$0xff]
      %v487 = vld [vmem:[%s3 + $0x8] sm:$0xff]
      %v488 = vld [vmem:[%s3 + $0x10] sm:$0xff]
      %v489 = vld [vmem:[%s3 + $0x18] sm:$0xff]
      %v490 = vld [vmem:[%s3 + $0x20] sm:$0xff]
      %v491 = vld [vmem:[%s3 + $0x28] sm:$0xff]
      %v492 = vld [vmem:[%s3 + $0x30] sm:$0xff]
      %v493 = vld [vmem:[%s3 + $0x38] sm:$0xff]
      %v494 = vld [vmem:[%s3 + $0x40] sm:$0xff]
      %v495 = vld [vmem:[%s3 + $0x48] sm:$0xff]
      %v496 = vld [vmem:[%s3 + $0x50] sm:$0xff]
      %v497 = vld [vmem:[%s3 + $0x58] sm:$0xff]
      %v498 = vld [vmem:[%s3 + $0x60] sm:$0xff]
      %v499 = vld [vmem:[%s3 + $0x68] sm:$0xff]
      %v500 = vld [vmem:[%s3 + $0x70] sm:$0xff]
      %v501 = vld [vmem:[%s3 + $0x78] sm:$0xff]
      %s502 = scalar_lea.vmem %s3, 128
      %v503 = vld [vmem:[%s502] sm:$0xff]
      %v504 = vld [vmem:[%s502 + $0x8] sm:$0xff]
      %v505 = vld [vmem:[%s502 + $0x10] sm:$0xff]
      %v506 = vld [vmem:[%s502 + $0x18] sm:$0xff]
      %v507 = vld [vmem:[%s502 + $0x20] sm:$0xff]
      %v508 = vld [vmem:[%s502 + $0x28] sm:$0xff]
      %v509 = vld [vmem:[%s502 + $0x30] sm:$0xff]
      %v510 = vld [vmem:[%s502 + $0x38] sm:$0xff]
      %v511 = vld [vmem:[%s502 + $0x40] sm:$0xff]
      %v512 = vld [vmem:[%s502 + $0x48] sm:$0xff]
      %v513 = vld [vmem:[%s502 + $0x50] sm:$0xff]
      %v514 = vld [vmem:[%s502 + $0x58] sm:$0xff]
      %v515 = vld [vmem:[%s502 + $0x60] sm:$0xff]
      %v516 = vld [vmem:[%s502 + $0x68] sm:$0xff]
      %v517 = vld [vmem:[%s502 + $0x70] sm:$0xff]
      %v518 = vld [vmem:[%s502 + $0x78] sm:$0xff]
      %519 = vmatpush.msra.mxu0 %v518
      %520 = vmatpush.msra.mxu0 %v517
      %521 = vmatpush.msra.mxu0 %v516
      %522 = vmatpush.msra.mxu0 %v515
      %523 = vmatpush.msra.mxu0 %v514
      %524 = vmatpush.msra.mxu0 %v513
      %525 = vmatpush.msra.mxu0 %v512
      %526 = vmatpush.msra.mxu0 %v511
      %527 = vmatpush.msra.mxu0 %v510
      %528 = vmatpush.msra.mxu0 %v509
      %529 = vmatpush.msra.mxu0 %v508
      %530 = vmatpush.msra.mxu0 %v507
      %531 = vmatpush.msra.mxu0 %v506
      %532 = vmatpush.msra.mxu0 %v505
      %533 = vmatpush.msra.mxu0 %v504
      %534 = vmatpush.msra.mxu0 %v503
      %535 = vmatmul.f32.gmra.mxu0 %v485
      %v536 = vpop.f32.mrf.mxu0
      %v537 = vadd.f32 0.0, %v536
      %538 = vdwg.mxu0
      %539 = vmatpush.msra.mxu0 %v501
      %540 = vmatpush.msra.mxu0 %v500
      %541 = vmatpush.msra.mxu0 %v499
      %542 = vmatpush.msra.mxu0 %v498
      %543 = vmatpush.msra.mxu0 %v497
      %544 = vmatpush.msra.mxu0 %v496
      %545 = vmatpush.msra.mxu0 %v495
      %546 = vmatpush.msra.mxu0 %v494
      %547 = vmatpush.msra.mxu0 %v493
      %548 = vmatpush.msra.mxu0 %v492
      %549 = vmatpush.msra.mxu0 %v491
      %550 = vmatpush.msra.mxu0 %v490
      %551 = vmatpush.msra.mxu0 %v489
      %552 = vmatpush.msra.mxu0 %v488
      %553 = vmatpush.msra.mxu0 %v487
      %554 = vmatpush.msra.mxu0 %v486
      %555 = vmatmul.f32.gmra.mxu0 %v220
      %v556 = vpop.f32.mrf.mxu0
      %v557 = vadd.f32 %v537, %v556
      %558 = vdwg.mxu0
      %v559 = vld [vmem:[%s4] sm:$0x1]
      %v560 = vperm.slane %v559, 0
      %v561 = vadd.f32 %v557, %v560
      %v563 = vrot.slane %v561, 7
      %v565 = vsel %vm224, 0.0, %v563
      %v566 = vsel %vm224, %v563, 0.0
      %s567 = scalar_lea.vmem %s1, 768
      %v568 = vld [vmem:[%s567] sm:$0xff]
      %v569 = vld [vmem:[%s567 + $0x8] sm:$0xff]
      %v570 = vld [vmem:[%s567 + $0x10] sm:$0xff]
      %v571 = vld [vmem:[%s567 + $0x18] sm:$0xff]
      %v572 = vld [vmem:[%s567 + $0x20] sm:$0xff]
      %v573 = vld [vmem:[%s567 + $0x28] sm:$0xff]
      %v574 = vld [vmem:[%s567 + $0x30] sm:$0xff]
      %v575 = vld [vmem:[%s567 + $0x38] sm:$0xff]
      %v576 = vld [vmem:[%s567 + $0x40] sm:$0xff]
      %v577 = vld [vmem:[%s567 + $0x48] sm:$0xff]
      %v578 = vld [vmem:[%s567 + $0x50] sm:$0xff]
      %v579 = vld [vmem:[%s567 + $0x58] sm:$0xff]
      %v580 = vld [vmem:[%s567 + $0x60] sm:$0xff]
      %v581 = vld [vmem:[%s567 + $0x68] sm:$0xff]
      %v582 = vld [vmem:[%s567 + $0x70] sm:$0xff]
      %v583 = vld [vmem:[%s567 + $0x78] sm:$0xff]
      %s584 = scalar_lea.vmem %s1, 896
      %v585 = vld [vmem:[%s584] sm:$0xff]
      %v586 = vld [vmem:[%s584 + $0x8] sm:$0xff]
      %v587 = vld [vmem:[%s584 + $0x10] sm:$0xff]
      %v588 = vld [vmem:[%s584 + $0x18] sm:$0xff]
      %v589 = vld [vmem:[%s584 + $0x20] sm:$0xff]
      %v590 = vld [vmem:[%s584 + $0x28] sm:$0xff]
      %v591 = vld [vmem:[%s584 + $0x30] sm:$0xff]
      %v592 = vld [vmem:[%s584 + $0x38] sm:$0xff]
      %v593 = vld [vmem:[%s584 + $0x40] sm:$0xff]
      %v594 = vld [vmem:[%s584 + $0x48] sm:$0xff]
      %v595 = vld [vmem:[%s584 + $0x50] sm:$0xff]
      %v596 = vld [vmem:[%s584 + $0x58] sm:$0xff]
      %v597 = vld [vmem:[%s584 + $0x60] sm:$0xff]
      %v598 = vld [vmem:[%s584 + $0x68] sm:$0xff]
      %v599 = vld [vmem:[%s584 + $0x70] sm:$0xff]
      %v600 = vld [vmem:[%s584 + $0x78] sm:$0xff]
      %v603 = vrot.slane %v565, 1
      %v604 = vrot.slane %v566, 1
      %v605 = vsel %vm262, %v603, %v604
      %607 = vmatpush.msra.mxu0 %v600
      %608 = vmatpush.msra.mxu0 %v599
      %609 = vmatpush.msra.mxu0 %v598
      %610 = vmatpush.msra.mxu0 %v597
      %611 = vmatpush.msra.mxu0 %v596
      %612 = vmatpush.msra.mxu0 %v595
      %613 = vmatpush.msra.mxu0 %v594
      %614 = vmatpush.msra.mxu0 %v593
      %615 = vmatpush.msra.mxu0 %v592
      %616 = vmatpush.msra.mxu0 %v591
      %617 = vmatpush.msra.mxu0 %v590
      %618 = vmatpush.msra.mxu0 %v589
      %619 = vmatpush.msra.mxu0 %v588
      %620 = vmatpush.msra.mxu0 %v587
      %621 = vmatpush.msra.mxu0 %v586
      %622 = vmatpush.msra.mxu0 %v585
      %623 = vmatmul.f32.gmra.mxu0 %v605
      %v624 = vpop.f32.mrf.mxu0
      %v625 = vadd.f32 0.0, %v624
      %626 = vdwg.mxu0
      %627 = vmatpush.msra.mxu0 %v583
      %628 = vmatpush.msra.mxu0 %v582
      %629 = vmatpush.msra.mxu0 %v581
      %630 = vmatpush.msra.mxu0 %v580
      %631 = vmatpush.msra.mxu0 %v579
      %632 = vmatpush.msra.mxu0 %v578
      %633 = vmatpush.msra.mxu0 %v577
      %634 = vmatpush.msra.mxu0 %v576
      %635 = vmatpush.msra.mxu0 %v575
      %636 = vmatpush.msra.mxu0 %v574
      %637 = vmatpush.msra.mxu0 %v573
      %638 = vmatpush.msra.mxu0 %v572
      %639 = vmatpush.msra.mxu0 %v571
      %640 = vmatpush.msra.mxu0 %v570
      %641 = vmatpush.msra.mxu0 %v569
      %642 = vmatpush.msra.mxu0 %v568
      %643 = vmatmul.f32.gmra.mxu0 %v565
      %v644 = vpop.f32.mrf.mxu0
      %v645 = vadd.f32 %v625, %v644
      %646 = vdwg.mxu0
      %s647 = scalar_lea.vmem %s1, 1024
      %v648 = vld [vmem:[%s647] sm:$0xff]
      %v649 = vld [vmem:[%s647 + $0x8] sm:$0xff]
      %v650 = vld [vmem:[%s647 + $0x10] sm:$0xff]
      %v651 = vld [vmem:[%s647 + $0x18] sm:$0xff]
      %v652 = vld [vmem:[%s647 + $0x20] sm:$0xff]
      %v653 = vld [vmem:[%s647 + $0x28] sm:$0xff]
      %v654 = vld [vmem:[%s647 + $0x30] sm:$0xff]
      %v655 = vld [vmem:[%s647 + $0x38] sm:$0xff]
      %v656 = vld [vmem:[%s647 + $0x40] sm:$0xff]
      %v657 = vld [vmem:[%s647 + $0x48] sm:$0xff]
      %v658 = vld [vmem:[%s647 + $0x50] sm:$0xff]
      %v659 = vld [vmem:[%s647 + $0x58] sm:$0xff]
      %v660 = vld [vmem:[%s647 + $0x60] sm:$0xff]
      %v661 = vld [vmem:[%s647 + $0x68] sm:$0xff]
      %v662 = vld [vmem:[%s647 + $0x70] sm:$0xff]
      %v663 = vld [vmem:[%s647 + $0x78] sm:$0xff]
      %v664 = vrot.slane %v565, 2
      %v665 = vrot.slane %v566, 2
      %v666 = vsel %vm324, %v664, %v665
      %668 = vmatpush.msra.mxu0 %v663
      %669 = vmatpush.msra.mxu0 %v662
      %670 = vmatpush.msra.mxu0 %v661
      %671 = vmatpush.msra.mxu0 %v660
      %672 = vmatpush.msra.mxu0 %v659
      %673 = vmatpush.msra.mxu0 %v658
      %674 = vmatpush.msra.mxu0 %v657
      %675 = vmatpush.msra.mxu0 %v656
      %676 = vmatpush.msra.mxu0 %v655
      %677 = vmatpush.msra.mxu0 %v654
      %678 = vmatpush.msra.mxu0 %v653
      %679 = vmatpush.msra.mxu0 %v652
      %680 = vmatpush.msra.mxu0 %v651
      %681 = vmatpush.msra.mxu0 %v650
      %682 = vmatpush.msra.mxu0 %v649
      %683 = vmatpush.msra.mxu0 %v648
      %684 = vmatmul.f32.gmra.mxu0 %v666
      %v685 = vpop.f32.mrf.mxu0
      %v686 = vadd.f32 0.0, %v685
      %687 = vdwg.mxu0
      %v688 = vadd.f32 %v645, %v686
      %v689 = vld [vmem:[%s2 + $0x2] sm:$0x1]
      %v690 = vperm.slane %v689, 0
      %v691 = vadd.f32 %v688, %v690
      %v692 = vmax.f32 %v691, 0.0
      %v694 = vrot.slane %v692, 7
      %v696 = vsel %vm224, 0.0, %v694
      %v697 = vsel %vm224, %v694, 0.0
      %s698 = scalar_lea.vmem %s1, 1152
      %v699 = vld [vmem:[%s698] sm:$0xff]
      %v700 = vld [vmem:[%s698 + $0x8] sm:$0xff]
      %v701 = vld [vmem:[%s698 + $0x10] sm:$0xff]
      %v702 = vld [vmem:[%s698 + $0x18] sm:$0xff]
      %v703 = vld [vmem:[%s698 + $0x20] sm:$0xff]
      %v704 = vld [vmem:[%s698 + $0x28] sm:$0xff]
      %v705 = vld [vmem:[%s698 + $0x30] sm:$0xff]
      %v706 = vld [vmem:[%s698 + $0x38] sm:$0xff]
      %v707 = vld [vmem:[%s698 + $0x40] sm:$0xff]
      %v708 = vld [vmem:[%s698 + $0x48] sm:$0xff]
      %v709 = vld [vmem:[%s698 + $0x50] sm:$0xff]
      %v710 = vld [vmem:[%s698 + $0x58] sm:$0xff]
      %v711 = vld [vmem:[%s698 + $0x60] sm:$0xff]
      %v712 = vld [vmem:[%s698 + $0x68] sm:$0xff]
      %v713 = vld [vmem:[%s698 + $0x70] sm:$0xff]
      %v714 = vld [vmem:[%s698 + $0x78] sm:$0xff]
      %s715 = scalar_lea.vmem %s1, 1280
      %v716 = vld [vmem:[%s715] sm:$0xff]
      %v717 = vld [vmem:[%s715 + $0x8] sm:$0xff]
      %v718 = vld [vmem:[%s715 + $0x10] sm:$0xff]
      %v719 = vld [vmem:[%s715 + $0x18] sm:$0xff]
      %v720 = vld [vmem:[%s715 + $0x20] sm:$0xff]
      %v721 = vld [vmem:[%s715 + $0x28] sm:$0xff]
      %v722 = vld [vmem:[%s715 + $0x30] sm:$0xff]
      %v723 = vld [vmem:[%s715 + $0x38] sm:$0xff]
      %v724 = vld [vmem:[%s715 + $0x40] sm:$0xff]
      %v725 = vld [vmem:[%s715 + $0x48] sm:$0xff]
      %v726 = vld [vmem:[%s715 + $0x50] sm:$0xff]
      %v727 = vld [vmem:[%s715 + $0x58] sm:$0xff]
      %v728 = vld [vmem:[%s715 + $0x60] sm:$0xff]
      %v729 = vld [vmem:[%s715 + $0x68] sm:$0xff]
      %v730 = vld [vmem:[%s715 + $0x70] sm:$0xff]
      %v731 = vld [vmem:[%s715 + $0x78] sm:$0xff]
      %v734 = vrot.slane %v696, 1
      %v735 = vrot.slane %v697, 1
      %v736 = vsel %vm262, %v734, %v735
      %738 = vmatpush.msra.mxu0 %v731
      %739 = vmatpush.msra.mxu0 %v730
      %740 = vmatpush.msra.mxu0 %v729
      %741 = vmatpush.msra.mxu0 %v728
      %742 = vmatpush.msra.mxu0 %v727
      %743 = vmatpush.msra.mxu0 %v726
      %744 = vmatpush.msra.mxu0 %v725
      %745 = vmatpush.msra.mxu0 %v724
      %746 = vmatpush.msra.mxu0 %v723
      %747 = vmatpush.msra.mxu0 %v722
      %748 = vmatpush.msra.mxu0 %v721
      %749 = vmatpush.msra.mxu0 %v720
      %750 = vmatpush.msra.mxu0 %v719
      %751 = vmatpush.msra.mxu0 %v718
      %752 = vmatpush.msra.mxu0 %v717
      %753 = vmatpush.msra.mxu0 %v716
      %754 = vmatmul.f32.gmra.mxu0 %v736
      %v755 = vpop.f32.mrf.mxu0
      %v756 = vadd.f32 0.0, %v755
      %757 = vdwg.mxu0
      %758 = vmatpush.msra.mxu0 %v714
      %759 = vmatpush.msra.mxu0 %v713
      %760 = vmatpush.msra.mxu0 %v712
      %761 = vmatpush.msra.mxu0 %v711
      %762 = vmatpush.msra.mxu0 %v710
      %763 = vmatpush.msra.mxu0 %v709
      %764 = vmatpush.msra.mxu0 %v708
      %765 = vmatpush.msra.mxu0 %v707
      %766 = vmatpush.msra.mxu0 %v706
      %767 = vmatpush.msra.mxu0 %v705
      %768 = vmatpush.msra.mxu0 %v704
      %769 = vmatpush.msra.mxu0 %v703
      %770 = vmatpush.msra.mxu0 %v702
      %771 = vmatpush.msra.mxu0 %v701
      %772 = vmatpush.msra.mxu0 %v700
      %773 = vmatpush.msra.mxu0 %v699
      %774 = vmatmul.f32.gmra.mxu0 %v696
      %v775 = vpop.f32.mrf.mxu0
      %v776 = vadd.f32 %v756, %v775
      %777 = vdwg.mxu0
      %s778 = scalar_lea.vmem %s1, 1408
      %v779 = vld [vmem:[%s778] sm:$0xff]
      %v780 = vld [vmem:[%s778 + $0x8] sm:$0xff]
      %v781 = vld [vmem:[%s778 + $0x10] sm:$0xff]
      %v782 = vld [vmem:[%s778 + $0x18] sm:$0xff]
      %v783 = vld [vmem:[%s778 + $0x20] sm:$0xff]
      %v784 = vld [vmem:[%s778 + $0x28] sm:$0xff]
      %v785 = vld [vmem:[%s778 + $0x30] sm:$0xff]
      %v786 = vld [vmem:[%s778 + $0x38] sm:$0xff]
      %v787 = vld [vmem:[%s778 + $0x40] sm:$0xff]
      %v788 = vld [vmem:[%s778 + $0x48] sm:$0xff]
      %v789 = vld [vmem:[%s778 + $0x50] sm:$0xff]
      %v790 = vld [vmem:[%s778 + $0x58] sm:$0xff]
      %v791 = vld [vmem:[%s778 + $0x60] sm:$0xff]
      %v792 = vld [vmem:[%s778 + $0x68] sm:$0xff]
      %v793 = vld [vmem:[%s778 + $0x70] sm:$0xff]
      %v794 = vld [vmem:[%s778 + $0x78] sm:$0xff]
      %v795 = vrot.slane %v696, 2
      %v796 = vrot.slane %v697, 2
      %v797 = vsel %vm324, %v795, %v796
      %799 = vmatpush.msra.mxu0 %v794
      %800 = vmatpush.msra.mxu0 %v793
      %801 = vmatpush.msra.mxu0 %v792
      %802 = vmatpush.msra.mxu0 %v791
      %803 = vmatpush.msra.mxu0 %v790
      %804 = vmatpush.msra.mxu0 %v789
      %805 = vmatpush.msra.mxu0 %v788
      %806 = vmatpush.msra.mxu0 %v787
      %807 = vmatpush.msra.mxu0 %v786
      %808 = vmatpush.msra.mxu0 %v785
      %809 = vmatpush.msra.mxu0 %v784
      %810 = vmatpush.msra.mxu0 %v783
      %811 = vmatpush.msra.mxu0 %v782
      %812 = vmatpush.msra.mxu0 %v781
      %813 = vmatpush.msra.mxu0 %v780
      %814 = vmatpush.msra.mxu0 %v779
      %815 = vmatmul.f32.gmra.mxu0 %v797
      %v816 = vpop.f32.mrf.mxu0
      %v817 = vadd.f32 0.0, %v816
      %818 = vdwg.mxu0
      %v819 = vadd.f32 %v776, %v817
      %v820 = vld [vmem:[%s2 + $0x3] sm:$0x1]
      %v821 = vperm.slane %v820, 0
      %v822 = vadd.f32 %v819, %v821
      %v823 = vadd.f32 %v822, %v561
      %v824 = vmax.f32 %v823, 0.0
      %s825 = scalar_lea.vmem %s3, 256
      %v826 = vld [vmem:[%s825] sm:$0xff]
      %v827 = vld [vmem:[%s825 + $0x8] sm:$0xff]
      %v828 = vld [vmem:[%s825 + $0x10] sm:$0xff]
      %v829 = vld [vmem:[%s825 + $0x18] sm:$0xff]
      %v830 = vld [vmem:[%s825 + $0x20] sm:$0xff]
      %v831 = vld [vmem:[%s825 + $0x28] sm:$0xff]
      %v832 = vld [vmem:[%s825 + $0x30] sm:$0xff]
      %v833 = vld [vmem:[%s825 + $0x38] sm:$0xff]
      %v834 = vld [vmem:[%s825 + $0x40] sm:$0xff]
      %v835 = vld [vmem:[%s825 + $0x48] sm:$0xff]
      %v836 = vld [vmem:[%s825 + $0x50] sm:$0xff]
      %v837 = vld [vmem:[%s825 + $0x58] sm:$0xff]
      %v838 = vld [vmem:[%s825 + $0x60] sm:$0xff]
      %v839 = vld [vmem:[%s825 + $0x68] sm:$0xff]
      %v840 = vld [vmem:[%s825 + $0x70] sm:$0xff]
      %v841 = vld [vmem:[%s825 + $0x78] sm:$0xff]
      %s842 = scalar_lea.vmem %s3, 384
      %v843 = vld [vmem:[%s842] sm:$0xff]
      %v844 = vld [vmem:[%s842 + $0x8] sm:$0xff]
      %v845 = vld [vmem:[%s842 + $0x10] sm:$0xff]
      %v846 = vld [vmem:[%s842 + $0x18] sm:$0xff]
      %v847 = vld [vmem:[%s842 + $0x20] sm:$0xff]
      %v848 = vld [vmem:[%s842 + $0x28] sm:$0xff]
      %v849 = vld [vmem:[%s842 + $0x30] sm:$0xff]
      %v850 = vld [vmem:[%s842 + $0x38] sm:$0xff]
      %v851 = vld [vmem:[%s842 + $0x40] sm:$0xff]
      %v852 = vld [vmem:[%s842 + $0x48] sm:$0xff]
      %v853 = vld [vmem:[%s842 + $0x50] sm:$0xff]
      %v854 = vld [vmem:[%s842 + $0x58] sm:$0xff]
      %v855 = vld [vmem:[%s842 + $0x60] sm:$0xff]
      %v856 = vld [vmem:[%s842 + $0x68] sm:$0xff]
      %v857 = vld [vmem:[%s842 + $0x70] sm:$0xff]
      %v858 = vld [vmem:[%s842 + $0x78] sm:$0xff]
      %859 = vmatpush.msra.mxu0 %v858
      %860 = vmatpush.msra.mxu0 %v857
      %861 = vmatpush.msra.mxu0 %v856
      %862 = vmatpush.msra.mxu0 %v855
      %863 = vmatpush.msra.mxu0 %v854
      %864 = vmatpush.msra.mxu0 %v853
      %865 = vmatpush.msra.mxu0 %v852
      %866 = vmatpush.msra.mxu0 %v851
      %867 = vmatpush.msra.mxu0 %v850
      %868 = vmatpush.msra.mxu0 %v849
      %869 = vmatpush.msra.mxu0 %v848
      %870 = vmatpush.msra.mxu0 %v847
      %871 = vmatpush.msra.mxu0 %v846
      %872 = vmatpush.msra.mxu0 %v845
      %873 = vmatpush.msra.mxu0 %v844
      %874 = vmatpush.msra.mxu0 %v843
      %875 = vmatmul.f32.gmra.mxu0 %v485
      %v876 = vpop.f32.mrf.mxu0
      %v877 = vadd.f32 0.0, %v876
      %878 = vdwg.mxu0
      %879 = vmatpush.msra.mxu0 %v841
      %880 = vmatpush.msra.mxu0 %v840
      %881 = vmatpush.msra.mxu0 %v839
      %882 = vmatpush.msra.mxu0 %v838
      %883 = vmatpush.msra.mxu0 %v837
      %884 = vmatpush.msra.mxu0 %v836
      %885 = vmatpush.msra.mxu0 %v835
      %886 = vmatpush.msra.mxu0 %v834
      %887 = vmatpush.msra.mxu0 %v833
      %888 = vmatpush.msra.mxu0 %v832
      %889 = vmatpush.msra.mxu0 %v831
      %890 = vmatpush.msra.mxu0 %v830
      %891 = vmatpush.msra.mxu0 %v829
      %892 = vmatpush.msra.mxu0 %v828
      %893 = vmatpush.msra.mxu0 %v827
      %894 = vmatpush.msra.mxu0 %v826
      %895 = vmatmul.f32.gmra.mxu0 %v220
      %v896 = vpop.f32.mrf.mxu0
      %v897 = vadd.f32 %v877, %v896
      %898 = vdwg.mxu0
      %s899 = scalar_lea.vmem %s3, 512
      %v900 = vld [vmem:[%s899] sm:$0xff]
      %v901 = vld [vmem:[%s899 + $0x8] sm:$0xff]
      %v902 = vld [vmem:[%s899 + $0x10] sm:$0xff]
      %v903 = vld [vmem:[%s899 + $0x18] sm:$0xff]
      %v904 = vld [vmem:[%s899 + $0x20] sm:$0xff]
      %v905 = vld [vmem:[%s899 + $0x28] sm:$0xff]
      %v906 = vld [vmem:[%s899 + $0x30] sm:$0xff]
      %v907 = vld [vmem:[%s899 + $0x38] sm:$0xff]
      %v908 = vld [vmem:[%s899 + $0x40] sm:$0xff]
      %v909 = vld [vmem:[%s899 + $0x48] sm:$0xff]
      %v910 = vld [vmem:[%s899 + $0x50] sm:$0xff]
      %v911 = vld [vmem:[%s899 + $0x58] sm:$0xff]
      %v912 = vld [vmem:[%s899 + $0x60] sm:$0xff]
      %v913 = vld [vmem:[%s899 + $0x68] sm:$0xff]
      %v914 = vld [vmem:[%s899 + $0x70] sm:$0xff]
      %v915 = vld [vmem:[%s899 + $0x78] sm:$0xff]
      %916 = vmatpush.msra.mxu0 %v915
      %917 = vmatpush.msra.mxu0 %v914
      %918 = vmatpush.msra.mxu0 %v913
      %919 = vmatpush.msra.mxu0 %v912
      %920 = vmatpush.msra.mxu0 %v911
      %921 = vmatpush.msra.mxu0 %v910
      %922 = vmatpush.msra.mxu0 %v909
      %923 = vmatpush.msra.mxu0 %v908
      %924 = vmatpush.msra.mxu0 %v907
      %925 = vmatpush.msra.mxu0 %v906
      %926 = vmatpush.msra.mxu0 %v905
      %927 = vmatpush.msra.mxu0 %v904
      %928 = vmatpush.msra.mxu0 %v903
      %929 = vmatpush.msra.mxu0 %v902
      %930 = vmatpush.msra.mxu0 %v901
      %931 = vmatpush.msra.mxu0 %v900
      %932 = vmatmul.f32.gmra.mxu0 %v824
      %v933 = vpop.f32.mrf.mxu0
      %v934 = vadd.f32 0.0, %v933
      %935 = vdwg.mxu0
      %v936 = vadd.f32 %v897, %v934
      %v937 = vld [vmem:[%s4 + $0x1] sm:$0x1]
      %v938 = vperm.slane %v937, 0
      %v939 = vadd.f32 %v936, %v938
      %v941 = vrot.slane %v939, 7
      %v943 = vsel %vm224, 0.0, %v941
      %v944 = vsel %vm224, %v941, 0.0
      %s945 = scalar_lea.vmem %s1, 1536
      %v946 = vld [vmem:[%s945] sm:$0xff]
      %v947 = vld [vmem:[%s945 + $0x8] sm:$0xff]
      %v948 = vld [vmem:[%s945 + $0x10] sm:$0xff]
      %v949 = vld [vmem:[%s945 + $0x18] sm:$0xff]
      %v950 = vld [vmem:[%s945 + $0x20] sm:$0xff]
      %v951 = vld [vmem:[%s945 + $0x28] sm:$0xff]
      %v952 = vld [vmem:[%s945 + $0x30] sm:$0xff]
      %v953 = vld [vmem:[%s945 + $0x38] sm:$0xff]
      %v954 = vld [vmem:[%s945 + $0x40] sm:$0xff]
      %v955 = vld [vmem:[%s945 + $0x48] sm:$0xff]
      %v956 = vld [vmem:[%s945 + $0x50] sm:$0xff]
      %v957 = vld [vmem:[%s945 + $0x58] sm:$0xff]
      %v958 = vld [vmem:[%s945 + $0x60] sm:$0xff]
      %v959 = vld [vmem:[%s945 + $0x68] sm:$0xff]
      %v960 = vld [vmem:[%s945 + $0x70] sm:$0xff]
      %v961 = vld [vmem:[%s945 + $0x78] sm:$0xff]
      %s962 = scalar_lea.vmem %s1, 1664
      %v963 = vld [vmem:[%s962] sm:$0xff]
      %v964 = vld [vmem:[%s962 + $0x8] sm:$0xff]
      %v965 = vld [vmem:[%s962 + $0x10] sm:$0xff]
      %v966 = vld [vmem:[%s962 + $0x18] sm:$0xff]
      %v967 = vld [vmem:[%s962 + $0x20] sm:$0xff]
      %v968 = vld [vmem:[%s962 + $0x28] sm:$0xff]
      %v969 = vld [vmem:[%s962 + $0x30] sm:$0xff]
      %v970 = vld [vmem:[%s962 + $0x38] sm:$0xff]
      %v971 = vld [vmem:[%s962 + $0x40] sm:$0xff]
      %v972 = vld [vmem:[%s962 + $0x48] sm:$0xff]
      %v973 = vld [vmem:[%s962 + $0x50] sm:$0xff]
      %v974 = vld [vmem:[%s962 + $0x58] sm:$0xff]
      %v975 = vld [vmem:[%s962 + $0x60] sm:$0xff]
      %v976 = vld [vmem:[%s962 + $0x68] sm:$0xff]
      %v977 = vld [vmem:[%s962 + $0x70] sm:$0xff]
      %v978 = vld [vmem:[%s962 + $0x78] sm:$0xff]
      %v981 = vrot.slane %v943, 1
      %v982 = vrot.slane %v944, 1
      %v983 = vsel %vm262, %v981, %v982
      %985 = vmatpush.msra.mxu0 %v978
      %986 = vmatpush.msra.mxu0 %v977
      %987 = vmatpush.msra.mxu0 %v976
      %988 = vmatpush.msra.mxu0 %v975
      %989 = vmatpush.msra.mxu0 %v974
      %990 = vmatpush.msra.mxu0 %v973
      %991 = vmatpush.msra.mxu0 %v972
      %992 = vmatpush.msra.mxu0 %v971
      %993 = vmatpush.msra.mxu0 %v970
      %994 = vmatpush.msra.mxu0 %v969
      %995 = vmatpush.msra.mxu0 %v968
      %996 = vmatpush.msra.mxu0 %v967
      %997 = vmatpush.msra.mxu0 %v966
      %998 = vmatpush.msra.mxu0 %v965
      %999 = vmatpush.msra.mxu0 %v964
      %1000 = vmatpush.msra.mxu0 %v963
      %1001 = vmatmul.f32.gmra.mxu0 %v983
      %v1002 = vpop.f32.mrf.mxu0
      %v1003 = vadd.f32 0.0, %v1002
      %1004 = vdwg.mxu0
      %1005 = vmatpush.msra.mxu0 %v961
      %1006 = vmatpush.msra.mxu0 %v960
      %1007 = vmatpush.msra.mxu0 %v959
      %1008 = vmatpush.msra.mxu0 %v958
      %1009 = vmatpush.msra.mxu0 %v957
      %1010 = vmatpush.msra.mxu0 %v956
      %1011 = vmatpush.msra.mxu0 %v955
      %1012 = vmatpush.msra.mxu0 %v954
      %1013 = vmatpush.msra.mxu0 %v953
      %1014 = vmatpush.msra.mxu0 %v952
      %1015 = vmatpush.msra.mxu0 %v951
      %1016 = vmatpush.msra.mxu0 %v950
      %1017 = vmatpush.msra.mxu0 %v949
      %1018 = vmatpush.msra.mxu0 %v948
      %1019 = vmatpush.msra.mxu0 %v947
      %1020 = vmatpush.msra.mxu0 %v946
      %1021 = vmatmul.f32.gmra.mxu0 %v943
      %v1022 = vpop.f32.mrf.mxu0
      %v1023 = vadd.f32 %v1003, %v1022
      %1024 = vdwg.mxu0
      %s1025 = scalar_lea.vmem %s1, 1792
      %v1026 = vld [vmem:[%s1025] sm:$0xff]
      %v1027 = vld [vmem:[%s1025 + $0x8] sm:$0xff]
      %v1028 = vld [vmem:[%s1025 + $0x10] sm:$0xff]
      %v1029 = vld [vmem:[%s1025 + $0x18] sm:$0xff]
      %v1030 = vld [vmem:[%s1025 + $0x20] sm:$0xff]
      %v1031 = vld [vmem:[%s1025 + $0x28] sm:$0xff]
      %v1032 = vld [vmem:[%s1025 + $0x30] sm:$0xff]
      %v1033 = vld [vmem:[%s1025 + $0x38] sm:$0xff]
      %v1034 = vld [vmem:[%s1025 + $0x40] sm:$0xff]
      %v1035 = vld [vmem:[%s1025 + $0x48] sm:$0xff]
      %v1036 = vld [vmem:[%s1025 + $0x50] sm:$0xff]
      %v1037 = vld [vmem:[%s1025 + $0x58] sm:$0xff]
      %v1038 = vld [vmem:[%s1025 + $0x60] sm:$0xff]
      %v1039 = vld [vmem:[%s1025 + $0x68] sm:$0xff]
      %v1040 = vld [vmem:[%s1025 + $0x70] sm:$0xff]
      %v1041 = vld [vmem:[%s1025 + $0x78] sm:$0xff]
      %v1042 = vrot.slane %v943, 2
      %v1043 = vrot.slane %v944, 2
      %v1044 = vsel %vm324, %v1042, %v1043
      %1046 = vmatpush.msra.mxu0 %v1041
      %1047 = vmatpush.msra.mxu0 %v1040
      %1048 = vmatpush.msra.mxu0 %v1039
      %1049 = vmatpush.msra.mxu0 %v1038
      %1050 = vmatpush.msra.mxu0 %v1037
      %1051 = vmatpush.msra.mxu0 %v1036
      %1052 = vmatpush.msra.mxu0 %v1035
      %1053 = vmatpush.msra.mxu0 %v1034
      %1054 = vmatpush.msra.mxu0 %v1033
      %1055 = vmatpush.msra.mxu0 %v1032
      %1056 = vmatpush.msra.mxu0 %v1031
      %1057 = vmatpush.msra.mxu0 %v1030
      %1058 = vmatpush.msra.mxu0 %v1029
      %1059 = vmatpush.msra.mxu0 %v1028
      %1060 = vmatpush.msra.mxu0 %v1027
      %1061 = vmatpush.msra.mxu0 %v1026
      %1062 = vmatmul.f32.gmra.mxu0 %v1044
      %v1063 = vpop.f32.mrf.mxu0
      %v1064 = vadd.f32 0.0, %v1063
      %1065 = vdwg.mxu0
      %v1066 = vadd.f32 %v1023, %v1064
      %v1067 = vld [vmem:[%s2 + $0x4] sm:$0x1]
      %v1068 = vperm.slane %v1067, 0
      %v1069 = vadd.f32 %v1066, %v1068
      %v1070 = vmax.f32 %v1069, 0.0
      %v1072 = vrot.slane %v1070, 7
      %v1074 = vsel %vm224, 0.0, %v1072
      %v1075 = vsel %vm224, %v1072, 0.0
      %s1076 = scalar_lea.vmem %s1, 1920
      %v1077 = vld [vmem:[%s1076] sm:$0xff]
      %v1078 = vld [vmem:[%s1076 + $0x8] sm:$0xff]
      %v1079 = vld [vmem:[%s1076 + $0x10] sm:$0xff]
      %v1080 = vld [vmem:[%s1076 + $0x18] sm:$0xff]
      %v1081 = vld [vmem:[%s1076 + $0x20] sm:$0xff]
      %v1082 = vld [vmem:[%s1076 + $0x28] sm:$0xff]
      %v1083 = vld [vmem:[%s1076 + $0x30] sm:$0xff]
      %v1084 = vld [vmem:[%s1076 + $0x38] sm:$0xff]
      %v1085 = vld [vmem:[%s1076 + $0x40] sm:$0xff]
      %v1086 = vld [vmem:[%s1076 + $0x48] sm:$0xff]
      %v1087 = vld [vmem:[%s1076 + $0x50] sm:$0xff]
      %v1088 = vld [vmem:[%s1076 + $0x58] sm:$0xff]
      %v1089 = vld [vmem:[%s1076 + $0x60] sm:$0xff]
      %v1090 = vld [vmem:[%s1076 + $0x68] sm:$0xff]
      %v1091 = vld [vmem:[%s1076 + $0x70] sm:$0xff]
      %v1092 = vld [vmem:[%s1076 + $0x78] sm:$0xff]
      %s1093 = scalar_lea.vmem %s1, 2048
      %v1094 = vld [vmem:[%s1093] sm:$0xff]
      %v1095 = vld [vmem:[%s1093 + $0x8] sm:$0xff]
      %v1096 = vld [vmem:[%s1093 + $0x10] sm:$0xff]
      %v1097 = vld [vmem:[%s1093 + $0x18] sm:$0xff]
      %v1098 = vld [vmem:[%s1093 + $0x20] sm:$0xff]
      %v1099 = vld [vmem:[%s1093 + $0x28] sm:$0xff]
      %v1100 = vld [vmem:[%s1093 + $0x30] sm:$0xff]
      %v1101 = vld [vmem:[%s1093 + $0x38] sm:$0xff]
      %v1102 = vld [vmem:[%s1093 + $0x40] sm:$0xff]
      %v1103 = vld [vmem:[%s1093 + $0x48] sm:$0xff]
      %v1104 = vld [vmem:[%s1093 + $0x50] sm:$0xff]
      %v1105 = vld [vmem:[%s1093 + $0x58] sm:$0xff]
      %v1106 = vld [vmem:[%s1093 + $0x60] sm:$0xff]
      %v1107 = vld [vmem:[%s1093 + $0x68] sm:$0xff]
      %v1108 = vld [vmem:[%s1093 + $0x70] sm:$0xff]
      %v1109 = vld [vmem:[%s1093 + $0x78] sm:$0xff]
      %v1112 = vrot.slane %v1074, 1
      %v1113 = vrot.slane %v1075, 1
      %v1114 = vsel %vm262, %v1112, %v1113
      %1116 = vmatpush.msra.mxu0 %v1109
      %1117 = vmatpush.msra.mxu0 %v1108
      %1118 = vmatpush.msra.mxu0 %v1107
      %1119 = vmatpush.msra.mxu0 %v1106
      %1120 = vmatpush.msra.mxu0 %v1105
      %1121 = vmatpush.msra.mxu0 %v1104
      %1122 = vmatpush.msra.mxu0 %v1103
      %1123 = vmatpush.msra.mxu0 %v1102
      %1124 = vmatpush.msra.mxu0 %v1101
      %1125 = vmatpush.msra.mxu0 %v1100
      %1126 = vmatpush.msra.mxu0 %v1099
      %1127 = vmatpush.msra.mxu0 %v1098
      %1128 = vmatpush.msra.mxu0 %v1097
      %1129 = vmatpush.msra.mxu0 %v1096
      %1130 = vmatpush.msra.mxu0 %v1095
      %1131 = vmatpush.msra.mxu0 %v1094
      %1132 = vmatmul.f32.gmra.mxu0 %v1114
      %v1133 = vpop.f32.mrf.mxu0
      %v1134 = vadd.f32 0.0, %v1133
      %1135 = vdwg.mxu0
      %1136 = vmatpush.msra.mxu0 %v1092
      %1137 = vmatpush.msra.mxu0 %v1091
      %1138 = vmatpush.msra.mxu0 %v1090
      %1139 = vmatpush.msra.mxu0 %v1089
      %1140 = vmatpush.msra.mxu0 %v1088
      %1141 = vmatpush.msra.mxu0 %v1087
      %1142 = vmatpush.msra.mxu0 %v1086
      %1143 = vmatpush.msra.mxu0 %v1085
      %1144 = vmatpush.msra.mxu0 %v1084
      %1145 = vmatpush.msra.mxu0 %v1083
      %1146 = vmatpush.msra.mxu0 %v1082
      %1147 = vmatpush.msra.mxu0 %v1081
      %1148 = vmatpush.msra.mxu0 %v1080
      %1149 = vmatpush.msra.mxu0 %v1079
      %1150 = vmatpush.msra.mxu0 %v1078
      %1151 = vmatpush.msra.mxu0 %v1077
      %1152 = vmatmul.f32.gmra.mxu0 %v1074
      %v1153 = vpop.f32.mrf.mxu0
      %v1154 = vadd.f32 %v1134, %v1153
      %1155 = vdwg.mxu0
      %s1156 = scalar_lea.vmem %s1, 2176
      %v1157 = vld [vmem:[%s1156] sm:$0xff]
      %v1158 = vld [vmem:[%s1156 + $0x8] sm:$0xff]
      %v1159 = vld [vmem:[%s1156 + $0x10] sm:$0xff]
      %v1160 = vld [vmem:[%s1156 + $0x18] sm:$0xff]
      %v1161 = vld [vmem:[%s1156 + $0x20] sm:$0xff]
      %v1162 = vld [vmem:[%s1156 + $0x28] sm:$0xff]
      %v1163 = vld [vmem:[%s1156 + $0x30] sm:$0xff]
      %v1164 = vld [vmem:[%s1156 + $0x38] sm:$0xff]
      %v1165 = vld [vmem:[%s1156 + $0x40] sm:$0xff]
      %v1166 = vld [vmem:[%s1156 + $0x48] sm:$0xff]
      %v1167 = vld [vmem:[%s1156 + $0x50] sm:$0xff]
      %v1168 = vld [vmem:[%s1156 + $0x58] sm:$0xff]
      %v1169 = vld [vmem:[%s1156 + $0x60] sm:$0xff]
      %v1170 = vld [vmem:[%s1156 + $0x68] sm:$0xff]
      %v1171 = vld [vmem:[%s1156 + $0x70] sm:$0xff]
      %v1172 = vld [vmem:[%s1156 + $0x78] sm:$0xff]
      %v1173 = vrot.slane %v1074, 2
      %v1174 = vrot.slane %v1075, 2
      %v1175 = vsel %vm324, %v1173, %v1174
      %1177 = vmatpush.msra.mxu0 %v1172
      %1178 = vmatpush.msra.mxu0 %v1171
      %1179 = vmatpush.msra.mxu0 %v1170
      %1180 = vmatpush.msra.mxu0 %v1169
      %1181 = vmatpush.msra.mxu0 %v1168
      %1182 = vmatpush.msra.mxu0 %v1167
      %1183 = vmatpush.msra.mxu0 %v1166
      %1184 = vmatpush.msra.mxu0 %v1165
      %1185 = vmatpush.msra.mxu0 %v1164
      %1186 = vmatpush.msra.mxu0 %v1163
      %1187 = vmatpush.msra.mxu0 %v1162
      %1188 = vmatpush.msra.mxu0 %v1161
      %1189 = vmatpush.msra.mxu0 %v1160
      %1190 = vmatpush.msra.mxu0 %v1159
      %1191 = vmatpush.msra.mxu0 %v1158
      %1192 = vmatpush.msra.mxu0 %v1157
      %1193 = vmatmul.f32.gmra.mxu0 %v1175
      %v1194 = vpop.f32.mrf.mxu0
      %v1195 = vadd.f32 0.0, %v1194
      %1196 = vdwg.mxu0
      %v1197 = vadd.f32 %v1154, %v1195
      %v1198 = vld [vmem:[%s2 + $0x5] sm:$0x1]
      %v1199 = vperm.slane %v1198, 0
      %v1200 = vadd.f32 %v1197, %v1199
      %v1201 = vadd.f32 %v1200, %v939
      %v1202 = vmax.f32 %v1201, 0.0
      %s1203 = scalar_lea.vmem %s3, 640
      %v1204 = vld [vmem:[%s1203] sm:$0xff]
      %v1205 = vld [vmem:[%s1203 + $0x8] sm:$0xff]
      %v1206 = vld [vmem:[%s1203 + $0x10] sm:$0xff]
      %v1207 = vld [vmem:[%s1203 + $0x18] sm:$0xff]
      %v1208 = vld [vmem:[%s1203 + $0x20] sm:$0xff]
      %v1209 = vld [vmem:[%s1203 + $0x28] sm:$0xff]
      %v1210 = vld [vmem:[%s1203 + $0x30] sm:$0xff]
      %v1211 = vld [vmem:[%s1203 + $0x38] sm:$0xff]
      %v1212 = vld [vmem:[%s1203 + $0x40] sm:$0xff]
      %v1213 = vld [vmem:[%s1203 + $0x48] sm:$0xff]
      %v1214 = vld [vmem:[%s1203 + $0x50] sm:$0xff]
      %v1215 = vld [vmem:[%s1203 + $0x58] sm:$0xff]
      %v1216 = vld [vmem:[%s1203 + $0x60] sm:$0xff]
      %v1217 = vld [vmem:[%s1203 + $0x68] sm:$0xff]
      %v1218 = vld [vmem:[%s1203 + $0x70] sm:$0xff]
      %v1219 = vld [vmem:[%s1203 + $0x78] sm:$0xff]
      %s1220 = scalar_lea.vmem %s3, 768
      %v1221 = vld [vmem:[%s1220] sm:$0xff]
      %v1222 = vld [vmem:[%s1220 + $0x8] sm:$0xff]
      %v1223 = vld [vmem:[%s1220 + $0x10] sm:$0xff]
      %v1224 = vld [vmem:[%s1220 + $0x18] sm:$0xff]
      %v1225 = vld [vmem:[%s1220 + $0x20] sm:$0xff]
      %v1226 = vld [vmem:[%s1220 + $0x28] sm:$0xff]
      %v1227 = vld [vmem:[%s1220 + $0x30] sm:$0xff]
      %v1228 = vld [vmem:[%s1220 + $0x38] sm:$0xff]
      %v1229 = vld [vmem:[%s1220 + $0x40] sm:$0xff]
      %v1230 = vld [vmem:[%s1220 + $0x48] sm:$0xff]
      %v1231 = vld [vmem:[%s1220 + $0x50] sm:$0xff]
      %v1232 = vld [vmem:[%s1220 + $0x58] sm:$0xff]
      %v1233 = vld [vmem:[%s1220 + $0x60] sm:$0xff]
      %v1234 = vld [vmem:[%s1220 + $0x68] sm:$0xff]
      %v1235 = vld [vmem:[%s1220 + $0x70] sm:$0xff]
      %v1236 = vld [vmem:[%s1220 + $0x78] sm:$0xff]
      %1237 = vmatpush.msra.mxu0 %v1236
      %1238 = vmatpush.msra.mxu0 %v1235
      %1239 = vmatpush.msra.mxu0 %v1234
      %1240 = vmatpush.msra.mxu0 %v1233
      %1241 = vmatpush.msra.mxu0 %v1232
      %1242 = vmatpush.msra.mxu0 %v1231
      %1243 = vmatpush.msra.mxu0 %v1230
      %1244 = vmatpush.msra.mxu0 %v1229
      %1245 = vmatpush.msra.mxu0 %v1228
      %1246 = vmatpush.msra.mxu0 %v1227
      %1247 = vmatpush.msra.mxu0 %v1226
      %1248 = vmatpush.msra.mxu0 %v1225
      %1249 = vmatpush.msra.mxu0 %v1224
      %1250 = vmatpush.msra.mxu0 %v1223
      %1251 = vmatpush.msra.mxu0 %v1222
      %1252 = vmatpush.msra.mxu0 %v1221
      %1253 = vmatmul.f32.gmra.mxu0 %v485
      %v1254 = vpop.f32.mrf.mxu0
      %v1255 = vadd.f32 0.0, %v1254
      %1256 = vdwg.mxu0
      %1257 = vmatpush.msra.mxu0 %v1219
      %1258 = vmatpush.msra.mxu0 %v1218
      %1259 = vmatpush.msra.mxu0 %v1217
      %1260 = vmatpush.msra.mxu0 %v1216
      %1261 = vmatpush.msra.mxu0 %v1215
      %1262 = vmatpush.msra.mxu0 %v1214
      %1263 = vmatpush.msra.mxu0 %v1213
      %1264 = vmatpush.msra.mxu0 %v1212
      %1265 = vmatpush.msra.mxu0 %v1211
      %1266 = vmatpush.msra.mxu0 %v1210
      %1267 = vmatpush.msra.mxu0 %v1209
      %1268 = vmatpush.msra.mxu0 %v1208
      %1269 = vmatpush.msra.mxu0 %v1207
      %1270 = vmatpush.msra.mxu0 %v1206
      %1271 = vmatpush.msra.mxu0 %v1205
      %1272 = vmatpush.msra.mxu0 %v1204
      %1273 = vmatmul.f32.gmra.mxu0 %v220
      %v1274 = vpop.f32.mrf.mxu0
      %v1275 = vadd.f32 %v1255, %v1274
      %1276 = vdwg.mxu0
      %s1277 = scalar_lea.vmem %s3, 896
      %v1278 = vld [vmem:[%s1277] sm:$0xff]
      %v1279 = vld [vmem:[%s1277 + $0x8] sm:$0xff]
      %v1280 = vld [vmem:[%s1277 + $0x10] sm:$0xff]
      %v1281 = vld [vmem:[%s1277 + $0x18] sm:$0xff]
      %v1282 = vld [vmem:[%s1277 + $0x20] sm:$0xff]
      %v1283 = vld [vmem:[%s1277 + $0x28] sm:$0xff]
      %v1284 = vld [vmem:[%s1277 + $0x30] sm:$0xff]
      %v1285 = vld [vmem:[%s1277 + $0x38] sm:$0xff]
      %v1286 = vld [vmem:[%s1277 + $0x40] sm:$0xff]
      %v1287 = vld [vmem:[%s1277 + $0x48] sm:$0xff]
      %v1288 = vld [vmem:[%s1277 + $0x50] sm:$0xff]
      %v1289 = vld [vmem:[%s1277 + $0x58] sm:$0xff]
      %v1290 = vld [vmem:[%s1277 + $0x60] sm:$0xff]
      %v1291 = vld [vmem:[%s1277 + $0x68] sm:$0xff]
      %v1292 = vld [vmem:[%s1277 + $0x70] sm:$0xff]
      %v1293 = vld [vmem:[%s1277 + $0x78] sm:$0xff]
      %1294 = vmatpush.msra.mxu0 %v1293
      %1295 = vmatpush.msra.mxu0 %v1292
      %1296 = vmatpush.msra.mxu0 %v1291
      %1297 = vmatpush.msra.mxu0 %v1290
      %1298 = vmatpush.msra.mxu0 %v1289
      %1299 = vmatpush.msra.mxu0 %v1288
      %1300 = vmatpush.msra.mxu0 %v1287
      %1301 = vmatpush.msra.mxu0 %v1286
      %1302 = vmatpush.msra.mxu0 %v1285
      %1303 = vmatpush.msra.mxu0 %v1284
      %1304 = vmatpush.msra.mxu0 %v1283
      %1305 = vmatpush.msra.mxu0 %v1282
      %1306 = vmatpush.msra.mxu0 %v1281
      %1307 = vmatpush.msra.mxu0 %v1280
      %1308 = vmatpush.msra.mxu0 %v1279
      %1309 = vmatpush.msra.mxu0 %v1278
      %1310 = vmatmul.f32.gmra.mxu0 %v824
      %v1311 = vpop.f32.mrf.mxu0
      %v1312 = vadd.f32 0.0, %v1311
      %1313 = vdwg.mxu0
      %v1314 = vadd.f32 %v1275, %v1312
      %s1315 = scalar_lea.vmem %s3, 1024
      %v1316 = vld [vmem:[%s1315] sm:$0xff]
      %v1317 = vld [vmem:[%s1315 + $0x8] sm:$0xff]
      %v1318 = vld [vmem:[%s1315 + $0x10] sm:$0xff]
      %v1319 = vld [vmem:[%s1315 + $0x18] sm:$0xff]
      %v1320 = vld [vmem:[%s1315 + $0x20] sm:$0xff]
      %v1321 = vld [vmem:[%s1315 + $0x28] sm:$0xff]
      %v1322 = vld [vmem:[%s1315 + $0x30] sm:$0xff]
      %v1323 = vld [vmem:[%s1315 + $0x38] sm:$0xff]
      %v1324 = vld [vmem:[%s1315 + $0x40] sm:$0xff]
      %v1325 = vld [vmem:[%s1315 + $0x48] sm:$0xff]
      %v1326 = vld [vmem:[%s1315 + $0x50] sm:$0xff]
      %v1327 = vld [vmem:[%s1315 + $0x58] sm:$0xff]
      %v1328 = vld [vmem:[%s1315 + $0x60] sm:$0xff]
      %v1329 = vld [vmem:[%s1315 + $0x68] sm:$0xff]
      %v1330 = vld [vmem:[%s1315 + $0x70] sm:$0xff]
      %v1331 = vld [vmem:[%s1315 + $0x78] sm:$0xff]
      %1332 = vmatpush.msra.mxu0 %v1331
      %1333 = vmatpush.msra.mxu0 %v1330
      %1334 = vmatpush.msra.mxu0 %v1329
      %1335 = vmatpush.msra.mxu0 %v1328
      %1336 = vmatpush.msra.mxu0 %v1327
      %1337 = vmatpush.msra.mxu0 %v1326
      %1338 = vmatpush.msra.mxu0 %v1325
      %1339 = vmatpush.msra.mxu0 %v1324
      %1340 = vmatpush.msra.mxu0 %v1323
      %1341 = vmatpush.msra.mxu0 %v1322
      %1342 = vmatpush.msra.mxu0 %v1321
      %1343 = vmatpush.msra.mxu0 %v1320
      %1344 = vmatpush.msra.mxu0 %v1319
      %1345 = vmatpush.msra.mxu0 %v1318
      %1346 = vmatpush.msra.mxu0 %v1317
      %1347 = vmatpush.msra.mxu0 %v1316
      %1348 = vmatmul.f32.gmra.mxu0 %v1202
      %v1349 = vpop.f32.mrf.mxu0
      %v1350 = vadd.f32 0.0, %v1349
      %1351 = vdwg.mxu0
      %v1352 = vadd.f32 %v1314, %v1350
      %v1353 = vld [vmem:[%s4 + $0x2] sm:$0x1]
      %v1354 = vperm.slane %v1353, 0
      %v1355 = vadd.f32 %v1352, %v1354
      %1356 = vst [vmem:[%s219] sm:$0xff] %v1355
      %p1357 = scmp.lt.s32.totalorder %s16, 1
      %s1358 = scalar_select %p1357, %s16, 1
      %s1359 = smul.addr %s1358, 8
      %s1360 = scalar_lea.vmem %s5, %s1359
      // Predicated region
      $region41: #{cascading_block.1} parent=39 // pred_check
        %p1361 = pneg %p144
      $region42: #{cascading_block.1} parent=39 // pred_check_branch
        %1363 = sbr.rel (%p1361) target = $region44
      $region43: #{cascading_block.1} parent=39 // pred_region
        _
      $region44: #{cascading_block.1} parent=39 // pred_fallthru
        _
    $region40: #{cascading_block.1} parent=5 // pred_fallthru
      _
    %p1364 = scmp.le.s32.totalorder 2, %s11
    // Predicated region
    $region45: #{cascading_block.1} parent=5 // pred_check
      %p1365 = pneg %p1364
    $region46: #{cascading_block.1} parent=5 // pred_check_branch
      %1367 = sbr.rel (%p1365) target = $region48
    $region47: #{cascading_block.1} parent=5 // pred_region
      %s1368 = ssub.s32 %s11, 2
      // Predicated region
      $region49: #{cascading_block.1} parent=47 // pred_check
        %p1369 = pneg %p150
      $region50: #{cascading_block.1} parent=47 // pred_check_branch
        %1371 = sbr.rel (%p1369) target = $region52
      $region51: #{cascading_block.1} parent=47 // pred_region
        %p1372 = scmp.lt.s32.totalorder %s17, 1
        %s1373 = scalar_select %p1372, %s17, 1
        %s1374 = smul.addr %s1373, 8
        %s1375 = scalar_lea.vmem %s5, %s1374
      $region52: #{cascading_block.1} parent=47 // pred_fallthru
        _
    $region48: #{cascading_block.1} parent=5 // pred_fallthru
      _
  $region6: #{cascading_block.1} parent=0 // loop_footer
    %s15 = sadd.s32 1, %s11
  $region7: #{cascading_block.1} parent=0 // loop_footer_branch
    %10 = sbr.rel target = $region3
  $region8: #{cascading_block.1} parent=0 // loop_exit
    _

</llo_original>
